<compile_context>
chip_gen: v7x
topology: tpu7x:2x2x1
jax: 0.10.0
libtpu: 0.0.40
codegen_flags: <defaults>
</compile_context>

<pallas_src>
from functools import partial

import numpy as np
import jax
import jax.numpy as jnp
from jax.experimental import pallas as pl
from jax.experimental.pallas import tpu as pltpu


# -----------------------------------------------------------------------------
# Pallas kernel: BB batch elements per grid step.
# -----------------------------------------------------------------------------
def dkvmn_kernel(L_real,
                 k_ref, v_ref, kw_ref, mv0_ref,
                 weaT_ref, bea_ref,
                 wfrT_ref, bf_ref,
                 wp_ref, bp_ref,
                 p_ref,
                 w_sc, e_sc, a_sc, rd_sc, fk_sc, mv_sc):
    BB, M, L_pad = w_sc.shape          # w scratch is stored transposed: (BB, M, L_pad)
    D = k_ref.shape[-1]
    N = BB * L_pad

    kb = k_ref[...]                    # (N, D) bf16
    vb = v_ref[...]                    # (N, D) bf16

    # --- fused k matmul against [Wfk^T | Mk^T] (bf16 x bf16, f32 accumulate) --
    kout = jnp.dot(kb, kw_ref[...], preferred_element_type=jnp.float32)   # (N, D+M)
    fk_sc[...] = kout[:, :D]                                              # k-part of f
    logits = kout[:, D:]                                                  # (N, M)

    # --- correlation weights: softmax over memory slots -----------------------
    logits = logits - jnp.max(logits, axis=-1, keepdims=True)
    expw = jnp.exp(logits)
    inv_sum = pl.reciprocal(jnp.sum(expw, axis=-1, keepdims=True), approx=True)
    w3 = (expw * inv_sum).reshape(BB, L_pad, M)
    # One amortized block transpose per grid step puts M on the sublane axis so
    # the serial recurrence never needs a lane->sublane relayout.
    w_sc[...] = jnp.transpose(w3, (0, 2, 1))                              # (BB, M, L_pad)

    # --- fused erase / add gates: one bf16 matmul against [We^T | Wa^T] -------
    ea = jnp.dot(vb, weaT_ref[...], preferred_element_type=jnp.float32) + bea_ref[...]
    e_sc[...] = jax.nn.sigmoid(ea[:, :D]).reshape(BB, L_pad, D)
    a_sc[...] = jnp.tanh(ea[:, D:]).reshape(BB, L_pad, D)

    # --- init memory state scratch from Mv0 (per batch row, bounded vregs) ----
    mv0 = mv0_ref[...]                                                    # (M, D)

    @pl.loop(0, BB)
    def _(b):
        mv_sc[b] = mv0

    # padded timesteps are never touched by the loop; zero their reads so the
    # (discarded) tail of f/p is well defined.
    if L_pad != L_real:
        rd_sc[:, pl.ds(L_real, L_pad - L_real), :] = jnp.zeros(
            (BB, L_pad - L_real, D), jnp.float32)

    # --- serial recurrence over the REAL sequence length only -----------------
    def step(t, carry):
        w_col = w_sc[:, :, pl.ds(t, 1)]            # (BB, M, 1)  - lane broadcast
        e_t = e_sc[:, pl.ds(t, 1), :]              # (BB, 1, D)  - sublane broadcast
        a_t = a_sc[:, pl.ds(t, 1), :]              # (BB, 1, D)
        mv = mv_sc[...]                            # (BB, M, D)  f32, VMEM resident
        wmv = w_col * mv
        # read from PRE-update memory (sublane reduce over M)
        rd_sc[:, pl.ds(t, 1), :] = jnp.sum(wmv, axis=1, keepdims=True)
        # rank-1 erase / add update, reusing wmv
        mv_sc[...] = mv - wmv * e_t + w_col * a_t
        return carry

    unroll = True if L_real <= 16 else 4
    jax.lax.fori_loop(0, L_real, step, 0, unroll=unroll)

    # --- f = tanh(read @ Wfr^T + k @ Wfk^T + bf) -------------------------------
    read2 = rd_sc[...].reshape(N, D).astype(jnp.bfloat16)
    f = jnp.tanh(
        jnp.dot(read2, wfrT_ref[...], preferred_element_type=jnp.float32)
        + fk_sc[...] + bf_ref[...])                                       # (N, D) f32

    # --- p = sigmoid(f . wp + bp): produce a lane-dense (1, N) row directly ---
    logit_row = jax.lax.dot_general(
        wp_ref[...], f, (((1,), (1,)), ((), ())),
        preferred_element_type=jnp.float32)                               # (1, N)
    p_ref[...] = jax.nn.sigmoid(logit_row + bp_ref[0]).reshape(1, 1, N)


# -----------------------------------------------------------------------------
# Wrapper: embeddings + parameter plumbing in plain JAX, hot path in Pallas.
# -----------------------------------------------------------------------------
def dkvmn_forward(q, r, params, *, target_rows=1024):
    """q, r: int32 (B, L). Returns dict with 'pred' (B, L-1), 'true' (B, L-1)."""
    num_skills = params['k_emb'].shape[0]
    M, D = params['Mk'].shape
    B, L = q.shape

    masked_r = r * (r > -1).astype(r.dtype)
    x = q + num_skills * masked_r
    k = params['k_emb'][q]          # (B, L, D) f32
    v = params['v_emb'][x]          # (B, L, D) f32

    # --- pad L to a sublane multiple (keeps in-kernel reshapes tile-aligned) --
    L_pad = -(-L // 8) * 8
    if L_pad != L:
        pad = ((0, 0), (0, L_pad - L), (0, 0))
        k = jnp.pad(k, pad)
        v = jnp.pad(v, pad)

    # --- batch block BB: ~target_rows MXU rows per step, but keep >= 2 grid
    # steps when the batch allows (megacore sharding on v7x) -------------------
    BB = max(1, target_rows // L_pad)
    if BB >= B:
        BB = max(1, (B + 1) // 2)
    B_pad = -(-B // BB) * BB
    G = B_pad // BB
    if B_pad != B:
        padb = ((0, B_pad - B), (0, 0), (0, 0))
        k = jnp.pad(k, padb)
        v = jnp.pad(v, padb)

    # stream activations batch-major flattened, in bf16 (f32 accumulation inside)
    k2d = k.reshape(B_pad * L_pad, D).astype(jnp.bfloat16)
    v2d = v.reshape(B_pad * L_pad, D).astype(jnp.bfloat16)

    # fused / pre-transposed weights; bf16 matmul operands, f32 biases
    kw = jnp.concatenate([params['Wf'][:, D:].T, params['Mk'].T],
                         axis=1).astype(jnp.bfloat16)                     # (D, D+M)
    weaT = jnp.concatenate([params['We'].T, params['Wa'].T],
                           axis=1).astype(jnp.bfloat16)                   # (D, 2D)
    wfrT = params['Wf'][:, :D].T.astype(jnp.bfloat16)                     # (D, D)
    bea = jnp.concatenate([params['be'], params['ba']]).reshape(1, 2 * D)
    bf = params['bf'].reshape(1, D)
    wp = params['Wp'].reshape(1, D)                                       # f32 row
    bp = params['bp'].reshape(1)                                          # SMEM scalar
    mv0 = params['Mv0']                                                   # (M, D) f32

    N = BB * L_pad
    kernel = partial(dkvmn_kernel, L)

    def full(shape):
        n = len(shape)
        return pl.BlockSpec(shape, lambda i, n=n: (0,) * n)

    p_full = pl.pallas_call(
        kernel,
        out_shape=jax.ShapeDtypeStruct((G, 1, N), jnp.float32),
        grid_spec=pltpu.PrefetchScalarGridSpec(
            num_scalar_prefetch=0,
            grid=(G,),
            in_specs=[
                pl.BlockSpec((N, D), lambda i: (i, 0)),            # k   (bf16)
                pl.BlockSpec((N, D), lambda i: (i, 0)),            # v   (bf16)
                full((D, D + M)),                                  # [Wfk^T | Mk^T]
                full((M, D)),                                      # Mv0
                full((D, 2 * D)),                                  # [We^T | Wa^T]
                full((1, 2 * D)),                                  # [be | ba]
                full((D, D)),                                      # Wfr^T
                full((1, D)),                                      # bf
                full((1, D)),                                      # Wp row
                pl.BlockSpec(memory_space=pltpu.MemorySpace.SMEM), # bp scalar
            ],
            out_specs=pl.BlockSpec((1, 1, N), lambda i: (i, 0, 0)),
            scratch_shapes=[
                pltpu.VMEM((BB, M, L_pad), jnp.float32),   # w (transposed)
                pltpu.VMEM((BB, L_pad, D), jnp.float32),   # e
                pltpu.VMEM((BB, L_pad, D), jnp.float32),   # a
                pltpu.VMEM((BB, L_pad, D), jnp.float32),   # read
                pltpu.VMEM((N, D), jnp.float32),           # k-part of f
                pltpu.VMEM((BB, M, D), jnp.float32),       # Mv state
            ],
        ),
        compiler_params=pltpu.CompilerParams(
            dimension_semantics=("parallel",)),   # shards batch grid across TCs (v7x)
    )(k2d, v2d, kw, mv0, weaT, bea, wfrT, bf, wp, bp)

    p2 = p_full.reshape(B_pad, L_pad)
    pred = p2[:B, 1:L]                            # (B, L-1)
    true = r[:, 1:].astype(jnp.float32)
    return {'pred': pred, 'true': true, 'state': None}


# -----------------------------------------------------------------------------
# Pure-JAX reference (mirrors the PyTorch forward) for validation.
# -----------------------------------------------------------------------------
def dkvmn_reference(q, r, params):
    num_skills = params['k_emb'].shape[0]
    masked_r = r * (r > -1).astype(r.dtype)
    x = q + num_skills * masked_r
    k = params['k_emb'][q]
    v = params['v_emb'][x]
    B, L, D = k.shape

    w = jax.nn.softmax(k @ params['Mk'].T, axis=-1)                  # (B, L, M)
    e = jax.nn.sigmoid(v @ params['We'].T + params['be'])
    a = jnp.tanh(v @ params['Wa'].T + params['ba'])

    Mvt = jnp.broadcast_to(params['Mv0'], (B,) + params['Mv0'].shape)
    reads = []
    for t in range(L):
        reads.append(jnp.einsum('bm,bmd->bd', w[:, t], Mvt))
        Mvt = (Mvt * (1.0 - w[:, t, :, None] * e[:, t, None, :])
               + w[:, t, :, None] * a[:, t, None, :])
    read = jnp.stack(reads, axis=1)                                  # (B, L, D)

    f = jnp.tanh(jnp.concatenate([read, k], axis=-1) @ params['Wf'].T + params['bf'])
    p = jax.nn.sigmoid(f @ params['Wp'].T + params['bp'])            # (B, L, 1)
    return p[:, 1:, 0]


# -----------------------------------------------------------------------------
# Deterministic parameter init (shapes from DKVMN.__init__; synthetic weights).
# -----------------------------------------------------------------------------
def init_params(key, num_skills, dim_s, size_m):
    ks = jax.random.split(key, 16)

    def linear(kw, kb, out_d, in_d):
        lim = 1.0 / np.sqrt(in_d)
        W = jax.random.uniform(kw, (out_d, in_d), jnp.float32, -lim, lim)
        b = jax.random.uniform(kb, (out_d,), jnp.float32, -lim, lim)
        return W, b

    params = {
        'k_emb': jax.random.normal(ks[0], (num_skills, dim_s), jnp.float32),
        'v_emb': jax.random.normal(ks[1], (2 * num_skills, dim_s), jnp.float32),
        # kaiming_normal_: std = sqrt(2 / fan_in), fan_in = dim_s
        'Mk': jax.random.normal(ks[2], (size_m, dim_s), jnp.float32) * np.sqrt(2.0 / dim_s),
        'Mv0': jax.random.normal(ks[3], (size_m, dim_s), jnp.float32) * np.sqrt(2.0 / dim_s),
    }
    params['Wf'], params['bf'] = linear(ks[4], ks[5], dim_s, 2 * dim_s)
    params['Wp'], params['bp'] = linear(ks[6], ks[7], 1, dim_s)
    params['We'], params['be'] = linear(ks[8], ks[9], dim_s, dim_s)
    params['Wa'], params['ba'] = linear(ks[10], ks[11], dim_s, dim_s)
    return params


if __name__ == "__main__":
    B, L = 2, 8
    NUM_SKILLS, DIM_S, SIZE_M = 10, 32, 16

    key = jax.random.PRNGKey(0)
    kp, kq, kr = jax.random.split(key, 3)
    params = init_params(kp, NUM_SKILLS, DIM_S, SIZE_M)

    q = jax.random.randint(kq, (B, L), 0, NUM_SKILLS, dtype=jnp.int32)
    r = jax.random.randint(kr, (B, L), -1, 2, dtype=jnp.int32)   # responses in {-1,0,1}

    out = dkvmn_forward(q, r, params)
    pred = jax.block_until_ready(out['pred'])

    ref = jax.block_until_ready(dkvmn_reference(q, r, params))
    # tolerance covers bf16-streamed activations/weights and approx-reciprocal softmax
    np.testing.assert_allclose(np.asarray(pred), np.asarray(ref), rtol=2e-2, atol=2e-2)
    assert pred.shape == (B, L - 1)
    assert out['true'].shape == (B, L - 1)

    print("KERNEL_OK")
</pallas_src>

<mosaic_0001>
module attributes {stable_mosaic.version = 11 : i64} {
  func.func @dkvmn_kernel(%arg0: i32, %arg1: memref<8x32xbf16, #tpu.memory_space<vmem>>, %arg2: memref<8x32xbf16, #tpu.memory_space<vmem>>, %arg3: memref<32x48xbf16, #tpu.memory_space<vmem>>, %arg4: memref<16x32xf32, #tpu.memory_space<vmem>>, %arg5: memref<32x64xbf16, #tpu.memory_space<vmem>>, %arg6: memref<1x64xf32, #tpu.memory_space<vmem>>, %arg7: memref<32x32xbf16, #tpu.memory_space<vmem>>, %arg8: memref<1x32xf32, #tpu.memory_space<vmem>>, %arg9: memref<1x32xf32, #tpu.memory_space<vmem>>, %arg10: memref<1xf32, #tpu.memory_space<smem>>, %arg11: memref<1x1x8xf32, #tpu.memory_space<vmem>>, %arg12: memref<1x16x8xf32, #tpu.memory_space<vmem>>, %arg13: memref<1x8x32xf32, #tpu.memory_space<vmem>>, %arg14: memref<1x8x32xf32, #tpu.memory_space<vmem>>, %arg15: memref<1x8x32xf32, #tpu.memory_space<vmem>>, %arg16: memref<8x32xf32, #tpu.memory_space<vmem>>, %arg17: memref<1x16x32xf32, #tpu.memory_space<vmem>>) attributes {dimension_semantics = [#tpu.dimension_semantics<parallel>], iteration_bounds = array<i64: 2>, scalar_prefetch = 0 : i64, scratch_operands = 6 : i64, tpu.core_type = #tpu.core_type<tc>, window_params = [{transform_indices = @transform_0, window_bounds = array<i64: 8, 32>}, {transform_indices = @transform_1, window_bounds = array<i64: 8, 32>}, {pipeline_mode = #tpu.pipeline_mode<synchronous>, transform_indices = @transform_2, window_bounds = array<i64: 32, 48>}, {pipeline_mode = #tpu.pipeline_mode<synchronous>, transform_indices = @transform_3, window_bounds = array<i64: 16, 32>}, {pipeline_mode = #tpu.pipeline_mode<synchronous>, transform_indices = @transform_4, window_bounds = array<i64: 32, 64>}, {pipeline_mode = #tpu.pipeline_mode<synchronous>, transform_indices = @transform_5, window_bounds = array<i64: 1, 64>}, {pipeline_mode = #tpu.pipeline_mode<synchronous>, transform_indices = @transform_6, window_bounds = array<i64: 32, 32>}, {pipeline_mode = #tpu.pipeline_mode<synchronous>, transform_indices = @transform_7, window_bounds = array<i64: 1, 32>}, {pipeline_mode = #tpu.pipeline_mode<synchronous>, transform_indices = @transform_8, window_bounds = array<i64: 1, 32>}, {transform_indices = @transform_9, window_bounds = array<i64: 1>}, {transform_indices = @transform_10, window_bounds = array<i64: 1, 1, 8>}]} {
    %c0 = arith.constant 0 : index
    %c0_0 = arith.constant 0 : index
    %0 = vector.load %arg1[%c0, %c0_0] : memref<8x32xbf16, #tpu.memory_space<vmem>>, vector<8x32xbf16>
    %c0_1 = arith.constant 0 : index
    %c0_2 = arith.constant 0 : index
    %1 = vector.load %arg2[%c0_1, %c0_2] : memref<8x32xbf16, #tpu.memory_space<vmem>>, vector<8x32xbf16>
    %c0_3 = arith.constant 0 : index
    %c0_4 = arith.constant 0 : index
    %2 = vector.load %arg3[%c0_3, %c0_4] : memref<32x48xbf16, #tpu.memory_space<vmem>>, vector<32x48xbf16>
    %cst = arith.constant dense<0.000000e+00> : vector<8x48xf32>
    %3 = tpu.matmul %0, %2, %cst {dimension_numbers = #tpu.dot_dimension_numbers<[1], [0], [0], [1], [0, 0, 1, 1], [], []>} : vector<8x32xbf16>, vector<32x48xbf16>, vector<8x48xf32> -> vector<8x48xf32>
    %4 = vector.extract_strided_slice %3 {offsets = [0, 0], sizes = [8, 32], strides = [1, 1]} : vector<8x48xf32> to vector<8x32xf32>
    %c0_5 = arith.constant 0 : index
    %c0_6 = arith.constant 0 : index
    %5 = vector.load %arg16[%c0_5, %c0_6] : memref<8x32xf32, #tpu.memory_space<vmem>>, vector<8x32xf32>
    tpu.vector_store %arg16[%c0_5, %c0_6], %4 {strides = array<i32>} : memref<8x32xf32, #tpu.memory_space<vmem>>, vector<8x32xf32>,
    %6 = vector.extract_strided_slice %3 {offsets = [0, 32], sizes = [8, 16], strides = [1, 1]} : vector<8x48xf32> to vector<8x16xf32>
    %cst_7 = arith.constant dense<0xFF800000> : vector<8xf32>
    %7 = vector.multi_reduction <maximumf>, %6, %cst_7 [1] : vector<8x16xf32> to vector<8xf32>
    %8 = vector.shape_cast %7 : vector<8xf32> to vector<8x1xf32>
    %9 = vector.broadcast %8 : vector<8x1xf32> to vector<8x16xf32>
    %10 = arith.subf %6, %9 : vector<8x16xf32>
    %11 = math.exp %10 : vector<8x16xf32>
    %cst_8 = arith.constant dense<0.000000e+00> : vector<8xf32>
    %12 = vector.multi_reduction <add>, %11, %cst_8 [1] : vector<8x16xf32> to vector<8xf32>
    %13 = vector.shape_cast %12 : vector<8xf32> to vector<8x1xf32>
    %14 = tpu.reciprocal %13 {approx = true} : vector<8x1xf32> -> vector<8x1xf32>
    %15 = vector.broadcast %14 : vector<8x1xf32> to vector<8x16xf32>
    %16 = arith.mulf %11, %15 : vector<8x16xf32>
    %17 = vector.shape_cast %16 : vector<8x16xf32> to vector<1x8x16xf32>
    %18 = tpu.transpose %17, [0, 2, 1] : vector<1x8x16xf32> -> vector<1x16x8xf32>
    %c0_9 = arith.constant 0 : index
    %c0_10 = arith.constant 0 : index
    %c0_11 = arith.constant 0 : index
    %19 = vector.load %arg12[%c0_9, %c0_10, %c0_11] : memref<1x16x8xf32, #tpu.memory_space<vmem>>, vector<1x16x8xf32>
    tpu.vector_store %arg12[%c0_9, %c0_10, %c0_11], %18 {strides = array<i32>} : memref<1x16x8xf32, #tpu.memory_space<vmem>>, vector<1x16x8xf32>,
    %c0_12 = arith.constant 0 : index
    %c0_13 = arith.constant 0 : index
    %20 = vector.load %arg5[%c0_12, %c0_13] : memref<32x64xbf16, #tpu.memory_space<vmem>>, vector<32x64xbf16>
    %cst_14 = arith.constant dense<0.000000e+00> : vector<8x64xf32>
    %21 = tpu.matmul %1, %20, %cst_14 {dimension_numbers = #tpu.dot_dimension_numbers<[1], [0], [0], [1], [0, 0, 1, 1], [], []>} : vector<8x32xbf16>, vector<32x64xbf16>, vector<8x64xf32> -> vector<8x64xf32>
    %c0_15 = arith.constant 0 : index
    %c0_16 = arith.constant 0 : index
    %22 = vector.load %arg6[%c0_15, %c0_16] : memref<1x64xf32, #tpu.memory_space<vmem>>, vector<1x64xf32>
    %23 = vector.broadcast %22 : vector<1x64xf32> to vector<8x64xf32>
    %24 = arith.addf %21, %23 : vector<8x64xf32>
    %25 = vector.extract_strided_slice %24 {offsets = [0, 0], sizes = [8, 32], strides = [1, 1]} : vector<8x64xf32> to vector<8x32xf32>
    %26 = arith.negf %25 : vector<8x32xf32>
    %27 = math.exp %26 : vector<8x32xf32>
    %cst_17 = arith.constant 1.000000e+00 : f32
    %28 = vector.broadcast %cst_17 : f32 to vector<8x32xf32>
    %29 = arith.addf %28, %27 : vector<8x32xf32>
    %30 = arith.divf %28, %29 : vector<8x32xf32>
    %31 = vector.shape_cast %30 : vector<8x32xf32> to vector<1x8x32xf32>
    %c0_18 = arith.constant 0 : index
    %c0_19 = arith.constant 0 : index
    %c0_20 = arith.constant 0 : index
    %32 = vector.load %arg13[%c0_18, %c0_19, %c0_20] : memref<1x8x32xf32, #tpu.memory_space<vmem>>, vector<1x8x32xf32>
    tpu.vector_store %arg13[%c0_18, %c0_19, %c0_20], %31 {strides = array<i32>} : memref<1x8x32xf32, #tpu.memory_space<vmem>>, vector<1x8x32xf32>,
    %33 = vector.extract_strided_slice %24 {offsets = [0, 32], sizes = [8, 32], strides = [1, 1]} : vector<8x64xf32> to vector<8x32xf32>
    %34 = math.tanh %33 : vector<8x32xf32>
    %35 = vector.shape_cast %34 : vector<8x32xf32> to vector<1x8x32xf32>
    %c0_21 = arith.constant 0 : index
    %c0_22 = arith.constant 0 : index
    %c0_23 = arith.constant 0 : index
    %36 = vector.load %arg14[%c0_21, %c0_22, %c0_23] : memref<1x8x32xf32, #tpu.memory_space<vmem>>, vector<1x8x32xf32>
    tpu.vector_store %arg14[%c0_21, %c0_22, %c0_23], %35 {strides = array<i32>} : memref<1x8x32xf32, #tpu.memory_space<vmem>>, vector<1x8x32xf32>,
    %c0_24 = arith.constant 0 : index
    %c0_25 = arith.constant 0 : index
    %37 = vector.load %arg4[%c0_24, %c0_25] : memref<16x32xf32, #tpu.memory_space<vmem>>, vector<16x32xf32>
    %c0_i32 = arith.constant 0 : i32
    %c1_i32 = arith.constant 1 : i32
    %38 = arith.muli %c0_i32, %c1_i32 : i32
    %c0_i32_26 = arith.constant 0 : i32
    %39 = arith.addi %c0_i32_26, %38 : i32
    %40 = arith.index_cast %39 : i32 to index
    %c0_27 = arith.constant 0 : index
    %c0_28 = arith.constant 0 : index
    %41 = vector.load %arg17[%40, %c0_27, %c0_28] : memref<1x16x32xf32, #tpu.memory_space<vmem>>, vector<1x16x32xf32>
    %42 = vector.shape_cast %41 : vector<1x16x32xf32> to vector<16x32xf32>
    %43 = vector.shape_cast %37 : vector<16x32xf32> to vector<1x16x32xf32>
    tpu.vector_store %arg17[%40, %c0_27, %c0_28], %43 {strides = array<i32>} : memref<1x16x32xf32, #tpu.memory_space<vmem>>, vector<1x16x32xf32>,
    %c1_i32_29 = arith.constant 1 : i32
    %c0_i32_30 = arith.constant 0 : i32
    %c0_31 = arith.constant 0 : index
    %c0_32 = arith.constant 0 : index
    %44 = arith.index_cast %c0_i32_30 : i32 to index
    %45 = vector.load %arg12[%c0_31, %c0_32, %44] : memref<1x16x8xf32, #tpu.memory_space<vmem>>, vector<1x16x1xf32>
    %c0_33 = arith.constant 0 : index
    %46 = arith.index_cast %c0_i32_30 : i32 to index
    %c0_34 = arith.constant 0 : index
    %47 = vector.load %arg13[%c0_33, %46, %c0_34] : memref<1x8x32xf32, #tpu.memory_space<vmem>>, vector<1x1x32xf32>
    %c0_35 = arith.constant 0 : index
    %48 = arith.index_cast %c0_i32_30 : i32 to index
    %c0_36 = arith.constant 0 : index
    %49 = vector.load %arg14[%c0_35, %48, %c0_36] : memref<1x8x32xf32, #tpu.memory_space<vmem>>, vector<1x1x32xf32>
    %c0_37 = arith.constant 0 : index
    %c0_38 = arith.constant 0 : index
    %c0_39 = arith.constant 0 : index
    %50 = vector.load %arg17[%c0_37, %c0_38, %c0_39] : memref<1x16x32xf32, #tpu.memory_space<vmem>>, vector<1x16x32xf32>
    %51 = vector.broadcast %45 : vector<1x16x1xf32> to vector<1x16x32xf32>
    %52 = arith.mulf %51, %50 : vector<1x16x32xf32>
    %cst_40 = arith.constant dense<0.000000e+00> : vector<1x32xf32>
    %53 = vector.multi_reduction <add>, %52, %cst_40 [1] : vector<1x16x32xf32> to vector<1x32xf32>
    %54 = vector.shape_cast %53 : vector<1x32xf32> to vector<1x1x32xf32>
    %c0_41 = arith.constant 0 : index
    %55 = arith.index_cast %c0_i32_30 : i32 to index
    %c0_42 = arith.constant 0 : index
    %56 = vector.load %arg15[%c0_41, %55, %c0_42] : memref<1x8x32xf32, #tpu.memory_space<vmem>>, vector<1x1x32xf32>
    tpu.vector_store %arg15[%c0_41, %55, %c0_42], %54 {strides = array<i32>} : memref<1x8x32xf32, #tpu.memory_space<vmem>>, vector<1x1x32xf32>,
    %57 = vector.broadcast %47 : vector<1x1x32xf32> to vector<1x16x32xf32>
    %58 = arith.mulf %52, %57 : vector<1x16x32xf32>
    %59 = arith.subf %50, %58 : vector<1x16x32xf32>
    %60 = vector.broadcast %45 : vector<1x16x1xf32> to vector<1x16x32xf32>
    %61 = vector.broadcast %49 : vector<1x1x32xf32> to vector<1x16x32xf32>
    %62 = arith.mulf %60, %61 : vector<1x16x32xf32>
    %63 = arith.addf %59, %62 : vector<1x16x32xf32>
    %c0_43 = arith.constant 0 : index
    %c0_44 = arith.constant 0 : index
    %c0_45 = arith.constant 0 : index
    %64 = vector.load %arg17[%c0_43, %c0_44, %c0_45] : memref<1x16x32xf32, #tpu.memory_space<vmem>>, vector<1x16x32xf32>
    tpu.vector_store %arg17[%c0_43, %c0_44, %c0_45], %63 {strides = array<i32>} : memref<1x16x32xf32, #tpu.memory_space<vmem>>, vector<1x16x32xf32>,
    %c1_i32_46 = arith.constant 1 : i32
    %c0_47 = arith.constant 0 : index
    %c0_48 = arith.constant 0 : index
    %65 = arith.index_cast %c1_i32_46 : i32 to index
    %66 = vector.load %arg12[%c0_47, %c0_48, %65] : memref<1x16x8xf32, #tpu.memory_space<vmem>>, vector<1x16x1xf32>
    %c0_49 = arith.constant 0 : index
    %67 = arith.index_cast %c1_i32_46 : i32 to index
    %c0_50 = arith.constant 0 : index
    %68 = vector.load %arg13[%c0_49, %67, %c0_50] : memref<1x8x32xf32, #tpu.memory_space<vmem>>, vector<1x1x32xf32>
    %c0_51 = arith.constant 0 : index
    %69 = arith.index_cast %c1_i32_46 : i32 to index
    %c0_52 = arith.constant 0 : index
    %70 = vector.load %arg14[%c0_51, %69, %c0_52] : memref<1x8x32xf32, #tpu.memory_space<vmem>>, vector<1x1x32xf32>
    %c0_53 = arith.constant 0 : index
    %c0_54 = arith.constant 0 : index
    %c0_55 = arith.constant 0 : index
    %71 = vector.load %arg17[%c0_53, %c0_54, %c0_55] : memref<1x16x32xf32, #tpu.memory_space<vmem>>, vector<1x16x32xf32>
    %72 = vector.broadcast %66 : vector<1x16x1xf32> to vector<1x16x32xf32>
    %73 = arith.mulf %72, %71 : vector<1x16x32xf32>
    %cst_56 = arith.constant dense<0.000000e+00> : vector<1x32xf32>
    %74 = vector.multi_reduction <add>, %73, %cst_56 [1] : vector<1x16x32xf32> to vector<1x32xf32>
    %75 = vector.shape_cast %74 : vector<1x32xf32> to vector<1x1x32xf32>
    %c0_57 = arith.constant 0 : index
    %76 = arith.index_cast %c1_i32_46 : i32 to index
    %c0_58 = arith.constant 0 : index
    %77 = vector.load %arg15[%c0_57, %76, %c0_58] : memref<1x8x32xf32, #tpu.memory_space<vmem>>, vector<1x1x32xf32>
    tpu.vector_store %arg15[%c0_57, %76, %c0_58], %75 {strides = array<i32>} : memref<1x8x32xf32, #tpu.memory_space<vmem>>, vector<1x1x32xf32>,
    %78 = vector.broadcast %68 : vector<1x1x32xf32> to vector<1x16x32xf32>
    %79 = arith.mulf %73, %78 : vector<1x16x32xf32>
    %80 = arith.subf %71, %79 : vector<1x16x32xf32>
    %81 = vector.broadcast %66 : vector<1x16x1xf32> to vector<1x16x32xf32>
    %82 = vector.broadcast %70 : vector<1x1x32xf32> to vector<1x16x32xf32>
    %83 = arith.mulf %81, %82 : vector<1x16x32xf32>
    %84 = arith.addf %80, %83 : vector<1x16x32xf32>
    %c0_59 = arith.constant 0 : index
    %c0_60 = arith.constant 0 : index
    %c0_61 = arith.constant 0 : index
    %85 = vector.load %arg17[%c0_59, %c0_60, %c0_61] : memref<1x16x32xf32, #tpu.memory_space<vmem>>, vector<1x16x32xf32>
    tpu.vector_store %arg17[%c0_59, %c0_60, %c0_61], %84 {strides = array<i32>} : memref<1x16x32xf32, #tpu.memory_space<vmem>>, vector<1x16x32xf32>,
    %c2_i32 = arith.constant 2 : i32
    %c0_62 = arith.constant 0 : index
    %c0_63 = arith.constant 0 : index
    %86 = arith.index_cast %c2_i32 : i32 to index
    %87 = vector.load %arg12[%c0_62, %c0_63, %86] : memref<1x16x8xf32, #tpu.memory_space<vmem>>, vector<1x16x1xf32>
    %c0_64 = arith.constant 0 : index
    %88 = arith.index_cast %c2_i32 : i32 to index
    %c0_65 = arith.constant 0 : index
    %89 = vector.load %arg13[%c0_64, %88, %c0_65] : memref<1x8x32xf32, #tpu.memory_space<vmem>>, vector<1x1x32xf32>
    %c0_66 = arith.constant 0 : index
    %90 = arith.index_cast %c2_i32 : i32 to index
    %c0_67 = arith.constant 0 : index
    %91 = vector.load %arg14[%c0_66, %90, %c0_67] : memref<1x8x32xf32, #tpu.memory_space<vmem>>, vector<1x1x32xf32>
    %c0_68 = arith.constant 0 : index
    %c0_69 = arith.constant 0 : index
    %c0_70 = arith.constant 0 : index
    %92 = vector.load %arg17[%c0_68, %c0_69, %c0_70] : memref<1x16x32xf32, #tpu.memory_space<vmem>>, vector<1x16x32xf32>
    %93 = vector.broadcast %87 : vector<1x16x1xf32> to vector<1x16x32xf32>
    %94 = arith.mulf %93, %92 : vector<1x16x32xf32>
    %cst_71 = arith.constant dense<0.000000e+00> : vector<1x32xf32>
    %95 = vector.multi_reduction <add>, %94, %cst_71 [1] : vector<1x16x32xf32> to vector<1x32xf32>
    %96 = vector.shape_cast %95 : vector<1x32xf32> to vector<1x1x32xf32>
    %c0_72 = arith.constant 0 : index
    %97 = arith.index_cast %c2_i32 : i32 to index
    %c0_73 = arith.constant 0 : index
    %98 = vector.load %arg15[%c0_72, %97, %c0_73] : memref<1x8x32xf32, #tpu.memory_space<vmem>>, vector<1x1x32xf32>
    tpu.vector_store %arg15[%c0_72, %97, %c0_73], %96 {strides = array<i32>} : memref<1x8x32xf32, #tpu.memory_space<vmem>>, vector<1x1x32xf32>,
    %99 = vector.broadcast %89 : vector<1x1x32xf32> to vector<1x16x32xf32>
    %100 = arith.mulf %94, %99 : vector<1x16x32xf32>
    %101 = arith.subf %92, %100 : vector<1x16x32xf32>
    %102 = vector.broadcast %87 : vector<1x16x1xf32> to vector<1x16x32xf32>
    %103 = vector.broadcast %91 : vector<1x1x32xf32> to vector<1x16x32xf32>
    %104 = arith.mulf %102, %103 : vector<1x16x32xf32>
    %105 = arith.addf %101, %104 : vector<1x16x32xf32>
    %c0_74 = arith.constant 0 : index
    %c0_75 = arith.constant 0 : index
    %c0_76 = arith.constant 0 : index
    %106 = vector.load %arg17[%c0_74, %c0_75, %c0_76] : memref<1x16x32xf32, #tpu.memory_space<vmem>>, vector<1x16x32xf32>
    tpu.vector_store %arg17[%c0_74, %c0_75, %c0_76], %105 {strides = array<i32>} : memref<1x16x32xf32, #tpu.memory_space<vmem>>, vector<1x16x32xf32>,
    %c3_i32 = arith.constant 3 : i32
    %c0_77 = arith.constant 0 : index
    %c0_78 = arith.constant 0 : index
    %107 = arith.index_cast %c3_i32 : i32 to index
    %108 = vector.load %arg12[%c0_77, %c0_78, %107] : memref<1x16x8xf32, #tpu.memory_space<vmem>>, vector<1x16x1xf32>
    %c0_79 = arith.constant 0 : index
    %109 = arith.index_cast %c3_i32 : i32 to index
    %c0_80 = arith.constant 0 : index
    %110 = vector.load %arg13[%c0_79, %109, %c0_80] : memref<1x8x32xf32, #tpu.memory_space<vmem>>, vector<1x1x32xf32>
    %c0_81 = arith.constant 0 : index
    %111 = arith.index_cast %c3_i32 : i32 to index
    %c0_82 = arith.constant 0 : index
    %112 = vector.load %arg14[%c0_81, %111, %c0_82] : memref<1x8x32xf32, #tpu.memory_space<vmem>>, vector<1x1x32xf32>
    %c0_83 = arith.constant 0 : index
    %c0_84 = arith.constant 0 : index
    %c0_85 = arith.constant 0 : index
    %113 = vector.load %arg17[%c0_83, %c0_84, %c0_85] : memref<1x16x32xf32, #tpu.memory_space<vmem>>, vector<1x16x32xf32>
    %114 = vector.broadcast %108 : vector<1x16x1xf32> to vector<1x16x32xf32>
    %115 = arith.mulf %114, %113 : vector<1x16x32xf32>
    %cst_86 = arith.constant dense<0.000000e+00> : vector<1x32xf32>
    %116 = vector.multi_reduction <add>, %115, %cst_86 [1] : vector<1x16x32xf32> to vector<1x32xf32>
    %117 = vector.shape_cast %116 : vector<1x32xf32> to vector<1x1x32xf32>
    %c0_87 = arith.constant 0 : index
    %118 = arith.index_cast %c3_i32 : i32 to index
    %c0_88 = arith.constant 0 : index
    %119 = vector.load %arg15[%c0_87, %118, %c0_88] : memref<1x8x32xf32, #tpu.memory_space<vmem>>, vector<1x1x32xf32>
    tpu.vector_store %arg15[%c0_87, %118, %c0_88], %117 {strides = array<i32>} : memref<1x8x32xf32, #tpu.memory_space<vmem>>, vector<1x1x32xf32>,
    %120 = vector.broadcast %110 : vector<1x1x32xf32> to vector<1x16x32xf32>
    %121 = arith.mulf %115, %120 : vector<1x16x32xf32>
    %122 = arith.subf %113, %121 : vector<1x16x32xf32>
    %123 = vector.broadcast %108 : vector<1x16x1xf32> to vector<1x16x32xf32>
    %124 = vector.broadcast %112 : vector<1x1x32xf32> to vector<1x16x32xf32>
    %125 = arith.mulf %123, %124 : vector<1x16x32xf32>
    %126 = arith.addf %122, %125 : vector<1x16x32xf32>
    %c0_89 = arith.constant 0 : index
    %c0_90 = arith.constant 0 : index
    %c0_91 = arith.constant 0 : index
    %127 = vector.load %arg17[%c0_89, %c0_90, %c0_91] : memref<1x16x32xf32, #tpu.memory_space<vmem>>, vector<1x16x32xf32>
    tpu.vector_store %arg17[%c0_89, %c0_90, %c0_91], %126 {strides = array<i32>} : memref<1x16x32xf32, #tpu.memory_space<vmem>>, vector<1x16x32xf32>,
    %c4_i32 = arith.constant 4 : i32
    %c0_92 = arith.constant 0 : index
    %c0_93 = arith.constant 0 : index
    %128 = arith.index_cast %c4_i32 : i32 to index
    %129 = vector.load %arg12[%c0_92, %c0_93, %128] : memref<1x16x8xf32, #tpu.memory_space<vmem>>, vector<1x16x1xf32>
    %c0_94 = arith.constant 0 : index
    %130 = arith.index_cast %c4_i32 : i32 to index
    %c0_95 = arith.constant 0 : index
    %131 = vector.load %arg13[%c0_94, %130, %c0_95] : memref<1x8x32xf32, #tpu.memory_space<vmem>>, vector<1x1x32xf32>
    %c0_96 = arith.constant 0 : index
    %132 = arith.index_cast %c4_i32 : i32 to index
    %c0_97 = arith.constant 0 : index
    %133 = vector.load %arg14[%c0_96, %132, %c0_97] : memref<1x8x32xf32, #tpu.memory_space<vmem>>, vector<1x1x32xf32>
    %c0_98 = arith.constant 0 : index
    %c0_99 = arith.constant 0 : index
    %c0_100 = arith.constant 0 : index
    %134 = vector.load %arg17[%c0_98, %c0_99, %c0_100] : memref<1x16x32xf32, #tpu.memory_space<vmem>>, vector<1x16x32xf32>
    %135 = vector.broadcast %129 : vector<1x16x1xf32> to vector<1x16x32xf32>
    %136 = arith.mulf %135, %134 : vector<1x16x32xf32>
    %cst_101 = arith.constant dense<0.000000e+00> : vector<1x32xf32>
    %137 = vector.multi_reduction <add>, %136, %cst_101 [1] : vector<1x16x32xf32> to vector<1x32xf32>
    %138 = vector.shape_cast %137 : vector<1x32xf32> to vector<1x1x32xf32>
    %c0_102 = arith.constant 0 : index
    %139 = arith.index_cast %c4_i32 : i32 to index
    %c0_103 = arith.constant 0 : index
    %140 = vector.load %arg15[%c0_102, %139, %c0_103] : memref<1x8x32xf32, #tpu.memory_space<vmem>>, vector<1x1x32xf32>
    tpu.vector_store %arg15[%c0_102, %139, %c0_103], %138 {strides = array<i32>} : memref<1x8x32xf32, #tpu.memory_space<vmem>>, vector<1x1x32xf32>,
    %141 = vector.broadcast %131 : vector<1x1x32xf32> to vector<1x16x32xf32>
    %142 = arith.mulf %136, %141 : vector<1x16x32xf32>
    %143 = arith.subf %134, %142 : vector<1x16x32xf32>
    %144 = vector.broadcast %129 : vector<1x16x1xf32> to vector<1x16x32xf32>
    %145 = vector.broadcast %133 : vector<1x1x32xf32> to vector<1x16x32xf32>
    %146 = arith.mulf %144, %145 : vector<1x16x32xf32>
    %147 = arith.addf %143, %146 : vector<1x16x32xf32>
    %c0_104 = arith.constant 0 : index
    %c0_105 = arith.constant 0 : index
    %c0_106 = arith.constant 0 : index
    %148 = vector.load %arg17[%c0_104, %c0_105, %c0_106] : memref<1x16x32xf32, #tpu.memory_space<vmem>>, vector<1x16x32xf32>
    tpu.vector_store %arg17[%c0_104, %c0_105, %c0_106], %147 {strides = array<i32>} : memref<1x16x32xf32, #tpu.memory_space<vmem>>, vector<1x16x32xf32>,
    %c5_i32 = arith.constant 5 : i32
    %c0_107 = arith.constant 0 : index
    %c0_108 = arith.constant 0 : index
    %149 = arith.index_cast %c5_i32 : i32 to index
    %150 = vector.load %arg12[%c0_107, %c0_108, %149] : memref<1x16x8xf32, #tpu.memory_space<vmem>>, vector<1x16x1xf32>
    %c0_109 = arith.constant 0 : index
    %151 = arith.index_cast %c5_i32 : i32 to index
    %c0_110 = arith.constant 0 : index
    %152 = vector.load %arg13[%c0_109, %151, %c0_110] : memref<1x8x32xf32, #tpu.memory_space<vmem>>, vector<1x1x32xf32>
    %c0_111 = arith.constant 0 : index
    %153 = arith.index_cast %c5_i32 : i32 to index
    %c0_112 = arith.constant 0 : index
    %154 = vector.load %arg14[%c0_111, %153, %c0_112] : memref<1x8x32xf32, #tpu.memory_space<vmem>>, vector<1x1x32xf32>
    %c0_113 = arith.constant 0 : index
    %c0_114 = arith.constant 0 : index
    %c0_115 = arith.constant 0 : index
    %155 = vector.load %arg17[%c0_113, %c0_114, %c0_115] : memref<1x16x32xf32, #tpu.memory_space<vmem>>, vector<1x16x32xf32>
    %156 = vector.broadcast %150 : vector<1x16x1xf32> to vector<1x16x32xf32>
    %157 = arith.mulf %156, %155 : vector<1x16x32xf32>
    %cst_116 = arith.constant dense<0.000000e+00> : vector<1x32xf32>
    %158 = vector.multi_reduction <add>, %157, %cst_116 [1] : vector<1x16x32xf32> to vector<1x32xf32>
    %159 = vector.shape_cast %158 : vector<1x32xf32> to vector<1x1x32xf32>
    %c0_117 = arith.constant 0 : index
    %160 = arith.index_cast %c5_i32 : i32 to index
    %c0_118 = arith.constant 0 : index
    %161 = vector.load %arg15[%c0_117, %160, %c0_118] : memref<1x8x32xf32, #tpu.memory_space<vmem>>, vector<1x1x32xf32>
    tpu.vector_store %arg15[%c0_117, %160, %c0_118], %159 {strides = array<i32>} : memref<1x8x32xf32, #tpu.memory_space<vmem>>, vector<1x1x32xf32>,
    %162 = vector.broadcast %152 : vector<1x1x32xf32> to vector<1x16x32xf32>
    %163 = arith.mulf %157, %162 : vector<1x16x32xf32>
    %164 = arith.subf %155, %163 : vector<1x16x32xf32>
    %165 = vector.broadcast %150 : vector<1x16x1xf32> to vector<1x16x32xf32>
    %166 = vector.broadcast %154 : vector<1x1x32xf32> to vector<1x16x32xf32>
    %167 = arith.mulf %165, %166 : vector<1x16x32xf32>
    %168 = arith.addf %164, %167 : vector<1x16x32xf32>
    %c0_119 = arith.constant 0 : index
    %c0_120 = arith.constant 0 : index
    %c0_121 = arith.constant 0 : index
    %169 = vector.load %arg17[%c0_119, %c0_120, %c0_121] : memref<1x16x32xf32, #tpu.memory_space<vmem>>, vector<1x16x32xf32>
    tpu.vector_store %arg17[%c0_119, %c0_120, %c0_121], %168 {strides = array<i32>} : memref<1x16x32xf32, #tpu.memory_space<vmem>>, vector<1x16x32xf32>,
    %c6_i32 = arith.constant 6 : i32
    %c0_122 = arith.constant 0 : index
    %c0_123 = arith.constant 0 : index
    %170 = arith.index_cast %c6_i32 : i32 to index
    %171 = vector.load %arg12[%c0_122, %c0_123, %170] : memref<1x16x8xf32, #tpu.memory_space<vmem>>, vector<1x16x1xf32>
    %c0_124 = arith.constant 0 : index
    %172 = arith.index_cast %c6_i32 : i32 to index
    %c0_125 = arith.constant 0 : index
    %173 = vector.load %arg13[%c0_124, %172, %c0_125] : memref<1x8x32xf32, #tpu.memory_space<vmem>>, vector<1x1x32xf32>
    %c0_126 = arith.constant 0 : index
    %174 = arith.index_cast %c6_i32 : i32 to index
    %c0_127 = arith.constant 0 : index
    %175 = vector.load %arg14[%c0_126, %174, %c0_127] : memref<1x8x32xf32, #tpu.memory_space<vmem>>, vector<1x1x32xf32>
    %c0_128 = arith.constant 0 : index
    %c0_129 = arith.constant 0 : index
    %c0_130 = arith.constant 0 : index
    %176 = vector.load %arg17[%c0_128, %c0_129, %c0_130] : memref<1x16x32xf32, #tpu.memory_space<vmem>>, vector<1x16x32xf32>
    %177 = vector.broadcast %171 : vector<1x16x1xf32> to vector<1x16x32xf32>
    %178 = arith.mulf %177, %176 : vector<1x16x32xf32>
    %cst_131 = arith.constant dense<0.000000e+00> : vector<1x32xf32>
    %179 = vector.multi_reduction <add>, %178, %cst_131 [1] : vector<1x16x32xf32> to vector<1x32xf32>
    %180 = vector.shape_cast %179 : vector<1x32xf32> to vector<1x1x32xf32>
    %c0_132 = arith.constant 0 : index
    %181 = arith.index_cast %c6_i32 : i32 to index
    %c0_133 = arith.constant 0 : index
    %182 = vector.load %arg15[%c0_132, %181, %c0_133] : memref<1x8x32xf32, #tpu.memory_space<vmem>>, vector<1x1x32xf32>
    tpu.vector_store %arg15[%c0_132, %181, %c0_133], %180 {strides = array<i32>} : memref<1x8x32xf32, #tpu.memory_space<vmem>>, vector<1x1x32xf32>,
    %183 = vector.broadcast %173 : vector<1x1x32xf32> to vector<1x16x32xf32>
    %184 = arith.mulf %178, %183 : vector<1x16x32xf32>
    %185 = arith.subf %176, %184 : vector<1x16x32xf32>
    %186 = vector.broadcast %171 : vector<1x16x1xf32> to vector<1x16x32xf32>
    %187 = vector.broadcast %175 : vector<1x1x32xf32> to vector<1x16x32xf32>
    %188 = arith.mulf %186, %187 : vector<1x16x32xf32>
    %189 = arith.addf %185, %188 : vector<1x16x32xf32>
    %c0_134 = arith.constant 0 : index
    %c0_135 = arith.constant 0 : index
    %c0_136 = arith.constant 0 : index
    %190 = vector.load %arg17[%c0_134, %c0_135, %c0_136] : memref<1x16x32xf32, #tpu.memory_space<vmem>>, vector<1x16x32xf32>
    tpu.vector_store %arg17[%c0_134, %c0_135, %c0_136], %189 {strides = array<i32>} : memref<1x16x32xf32, #tpu.memory_space<vmem>>, vector<1x16x32xf32>,
    %c7_i32 = arith.constant 7 : i32
    %c0_137 = arith.constant 0 : index
    %c0_138 = arith.constant 0 : index
    %191 = arith.index_cast %c7_i32 : i32 to index
    %192 = vector.load %arg12[%c0_137, %c0_138, %191] : memref<1x16x8xf32, #tpu.memory_space<vmem>>, vector<1x16x1xf32>
    %c0_139 = arith.constant 0 : index
    %193 = arith.index_cast %c7_i32 : i32 to index
    %c0_140 = arith.constant 0 : index
    %194 = vector.load %arg13[%c0_139, %193, %c0_140] : memref<1x8x32xf32, #tpu.memory_space<vmem>>, vector<1x1x32xf32>
    %c0_141 = arith.constant 0 : index
    %195 = arith.index_cast %c7_i32 : i32 to index
    %c0_142 = arith.constant 0 : index
    %196 = vector.load %arg14[%c0_141, %195, %c0_142] : memref<1x8x32xf32, #tpu.memory_space<vmem>>, vector<1x1x32xf32>
    %c0_143 = arith.constant 0 : index
    %c0_144 = arith.constant 0 : index
    %c0_145 = arith.constant 0 : index
    %197 = vector.load %arg17[%c0_143, %c0_144, %c0_145] : memref<1x16x32xf32, #tpu.memory_space<vmem>>, vector<1x16x32xf32>
    %198 = vector.broadcast %192 : vector<1x16x1xf32> to vector<1x16x32xf32>
    %199 = arith.mulf %198, %197 : vector<1x16x32xf32>
    %cst_146 = arith.constant dense<0.000000e+00> : vector<1x32xf32>
    %200 = vector.multi_reduction <add>, %199, %cst_146 [1] : vector<1x16x32xf32> to vector<1x32xf32>
    %201 = vector.shape_cast %200 : vector<1x32xf32> to vector<1x1x32xf32>
    %c0_147 = arith.constant 0 : index
    %202 = arith.index_cast %c7_i32 : i32 to index
    %c0_148 = arith.constant 0 : index
    %203 = vector.load %arg15[%c0_147, %202, %c0_148] : memref<1x8x32xf32, #tpu.memory_space<vmem>>, vector<1x1x32xf32>
    tpu.vector_store %arg15[%c0_147, %202, %c0_148], %201 {strides = array<i32>} : memref<1x8x32xf32, #tpu.memory_space<vmem>>, vector<1x1x32xf32>,
    %204 = vector.broadcast %194 : vector<1x1x32xf32> to vector<1x16x32xf32>
    %205 = arith.mulf %199, %204 : vector<1x16x32xf32>
    %206 = arith.subf %197, %205 : vector<1x16x32xf32>
    %207 = vector.broadcast %192 : vector<1x16x1xf32> to vector<1x16x32xf32>
    %208 = vector.broadcast %196 : vector<1x1x32xf32> to vector<1x16x32xf32>
    %209 = arith.mulf %207, %208 : vector<1x16x32xf32>
    %210 = arith.addf %206, %209 : vector<1x16x32xf32>
    %c0_149 = arith.constant 0 : index
    %c0_150 = arith.constant 0 : index
    %c0_151 = arith.constant 0 : index
    %211 = vector.load %arg17[%c0_149, %c0_150, %c0_151] : memref<1x16x32xf32, #tpu.memory_space<vmem>>, vector<1x16x32xf32>
    tpu.vector_store %arg17[%c0_149, %c0_150, %c0_151], %210 {strides = array<i32>} : memref<1x16x32xf32, #tpu.memory_space<vmem>>, vector<1x16x32xf32>,
    %c8_i32 = arith.constant 8 : i32
    %c0_152 = arith.constant 0 : index
    %c0_153 = arith.constant 0 : index
    %c0_154 = arith.constant 0 : index
    %212 = vector.load %arg15[%c0_152, %c0_153, %c0_154] : memref<1x8x32xf32, #tpu.memory_space<vmem>>, vector<1x8x32xf32>
    %213 = vector.shape_cast %212 : vector<1x8x32xf32> to vector<8x32xf32>
    %214 = arith.truncf %213 : vector<8x32xf32> to vector<8x32xbf16>
    %c0_155 = arith.constant 0 : index
    %c0_156 = arith.constant 0 : index
    %215 = vector.load %arg7[%c0_155, %c0_156] : memref<32x32xbf16, #tpu.memory_space<vmem>>, vector<32x32xbf16>
    %cst_157 = arith.constant dense<0.000000e+00> : vector<8x32xf32>
    %216 = tpu.matmul %214, %215, %cst_157 {dimension_numbers = #tpu.dot_dimension_numbers<[1], [0], [0], [1], [0, 0, 1, 1], [], []>} : vector<8x32xbf16>, vector<32x32xbf16>, vector<8x32xf32> -> vector<8x32xf32>
    %c0_158 = arith.constant 0 : index
    %c0_159 = arith.constant 0 : index
    %217 = vector.load %arg16[%c0_158, %c0_159] : memref<8x32xf32, #tpu.memory_space<vmem>>, vector<8x32xf32>
    %218 = arith.addf %216, %217 : vector<8x32xf32>
    %c0_160 = arith.constant 0 : index
    %c0_161 = arith.constant 0 : index
    %219 = vector.load %arg8[%c0_160, %c0_161] : memref<1x32xf32, #tpu.memory_space<vmem>>, vector<1x32xf32>
    %220 = vector.broadcast %219 : vector<1x32xf32> to vector<8x32xf32>
    %221 = arith.addf %218, %220 : vector<8x32xf32>
    %222 = math.tanh %221 : vector<8x32xf32>
    %c0_162 = arith.constant 0 : index
    %c0_163 = arith.constant 0 : index
    %223 = vector.load %arg9[%c0_162, %c0_163] : memref<1x32xf32, #tpu.memory_space<vmem>>, vector<1x32xf32>
    %cst_164 = arith.constant dense<0.000000e+00> : vector<1x8xf32>
    %224 = tpu.matmul %223, %222, %cst_164 {dimension_numbers = #tpu.dot_dimension_numbers<[1], [1], [0], [0], [0, 0, 1, 0], [], []>} : vector<1x32xf32>, vector<8x32xf32>, vector<1x8xf32> -> vector<1x8xf32>
    %c0_165 = arith.constant 0 : index
    %225 = memref.load %arg10[%c0_165] : memref<1xf32, #tpu.memory_space<smem>>
    %226 = vector.broadcast %225 : f32 to vector<1x8xf32>
    %227 = arith.addf %224, %226 : vector<1x8xf32>
    %228 = arith.negf %227 : vector<1x8xf32>
    %229 = math.exp %228 : vector<1x8xf32>
    %cst_166 = arith.constant 1.000000e+00 : f32
    %230 = vector.broadcast %cst_166 : f32 to vector<1x8xf32>
    %231 = arith.addf %230, %229 : vector<1x8xf32>
    %232 = arith.divf %230, %231 : vector<1x8xf32>
    %233 = vector.shape_cast %232 : vector<1x8xf32> to vector<1x1x8xf32>
    %c0_167 = arith.constant 0 : index
    %c0_168 = arith.constant 0 : index
    %c0_169 = arith.constant 0 : index
    %234 = vector.load %arg11[%c0_167, %c0_168, %c0_169] : memref<1x1x8xf32, #tpu.memory_space<vmem>>, vector<1x1x8xf32>
    tpu.vector_store %arg11[%c0_167, %c0_168, %c0_169], %233 {strides = array<i32>} : memref<1x1x8xf32, #tpu.memory_space<vmem>>, vector<1x1x8xf32>,
    return
  }
  func.func @transform_0(%arg0: i32) -> (i32, i32) {
    %c0_i32 = arith.constant 0 : i32
    %c0_i32_0 = arith.constant 0 : i32
    return %arg0, %c0_i32 : i32, i32
  }
  func.func @transform_1(%arg0: i32) -> (i32, i32) {
    %c0_i32 = arith.constant 0 : i32
    %c0_i32_0 = arith.constant 0 : i32
    return %arg0, %c0_i32 : i32, i32
  }
  func.func @transform_2(%arg0: i32) -> (i32, i32) {
    %c0_i32 = arith.constant 0 : i32
    %c0_i32_0 = arith.constant 0 : i32
    %c0_i32_1 = arith.constant 0 : i32
    return %c0_i32, %c0_i32_0 : i32, i32
  }
  func.func @transform_3(%arg0: i32) -> (i32, i32) {
    %c0_i32 = arith.constant 0 : i32
    %c0_i32_0 = arith.constant 0 : i32
    %c0_i32_1 = arith.constant 0 : i32
    return %c0_i32, %c0_i32_0 : i32, i32
  }
  func.func @transform_4(%arg0: i32) -> (i32, i32) {
    %c0_i32 = arith.constant 0 : i32
    %c0_i32_0 = arith.constant 0 : i32
    %c0_i32_1 = arith.constant 0 : i32
    return %c0_i32, %c0_i32_0 : i32, i32
  }
  func.func @transform_5(%arg0: i32) -> (i32, i32) {
    %c0_i32 = arith.constant 0 : i32
    %c0_i32_0 = arith.constant 0 : i32
    %c0_i32_1 = arith.constant 0 : i32
    return %c0_i32, %c0_i32_0 : i32, i32
  }
  func.func @transform_6(%arg0: i32) -> (i32, i32) {
    %c0_i32 = arith.constant 0 : i32
    %c0_i32_0 = arith.constant 0 : i32
    %c0_i32_1 = arith.constant 0 : i32
    return %c0_i32, %c0_i32_0 : i32, i32
  }
  func.func @transform_7(%arg0: i32) -> (i32, i32) {
    %c0_i32 = arith.constant 0 : i32
    %c0_i32_0 = arith.constant 0 : i32
    %c0_i32_1 = arith.constant 0 : i32
    return %c0_i32, %c0_i32_0 : i32, i32
  }
  func.func @transform_8(%arg0: i32) -> (i32, i32) {
    %c0_i32 = arith.constant 0 : i32
    %c0_i32_0 = arith.constant 0 : i32
    %c0_i32_1 = arith.constant 0 : i32
    return %c0_i32, %c0_i32_0 : i32, i32
  }
  func.func @transform_9(%arg0: i32) -> i32 {
    %c0_i32 = arith.constant 0 : i32
    %c0_i32_0 = arith.constant 0 : i32
    return %c0_i32 : i32
  }
  func.func @transform_10(%arg0: i32) -> (i32, i32, i32) {
    %c0_i32 = arith.constant 0 : i32
    %c0_i32_0 = arith.constant 0 : i32
    %c0_i32_1 = arith.constant 0 : i32
    return %arg0, %c0_i32, %c0_i32_0 : i32, i32, i32
  }
}

</mosaic_0001>

<llo_original>
// kernel: tpu_custom_call.1
$region0: #{tpu_custom_call.1}
  #allocation0 [shape = 'u32[]', space=smem, size = 0x4, offset = 0x4, fixed_abs, tag = 'smem constant byte address 0x4 - core index']
  #allocation1 [shape = 'u32[144,128]{1,0:T(1,128)}', space=vmem, size = 0x12000, scoped, tag = 'internal scratch']
  #allocation2 [shape = 'f32[1,16,8]{2,1,0:T(8,128)}', space=vmem, size = 0x2000, scoped, tag = 'scratch operand']
  #allocation3 [shape = 'f32[1,8,32]{2,1,0:T(8,128)}', space=vmem, size = 0x1000, scoped, tag = 'scratch operand']
  #allocation4 [shape = 'f32[1,8,32]{2,1,0:T(8,128)}', space=vmem, size = 0x1000, scoped, tag = 'scratch operand']
  #allocation5 [shape = 'f32[1,8,32]{2,1,0:T(8,128)}', space=vmem, size = 0x1000, scoped, tag = 'scratch operand']
  #allocation6 [shape = 'f32[8,32]{1,0:T(8,128)}', space=vmem, size = 0x1000, scoped, tag = 'scratch operand']
  #allocation7 [shape = 'f32[1,16,32]{2,1,0:T(8,128)}', space=vmem, size = 0x2000, scoped, tag = 'scratch operand']
  #allocation8 [shape = 'f32[1]{0:T(128)S(6)}', space=smem, size = 0x200, scoped, tag = 'scoped memory for tpu_custom_call.1']
  %s0 = inlined_call_operand.hbm [shape: bf16[16,32], index: 0, kind: input, shape index: {}]
  %s1 = inlined_call_operand.hbm [shape: bf16[16,32], index: 1, kind: input, shape index: {}]
  %s2 = inlined_call_operand.hbm [shape: bf16[32,48], index: 2, kind: input, shape index: {}]
  %s3 = inlined_call_operand.hbm [shape: f32[16,32], index: 3, kind: input, shape index: {}]
  %s4 = inlined_call_operand.vmem [shape: bf16[32,64], index: 4, kind: input, shape index: {}]
  %s5 = inlined_call_operand.vmem [shape: f32[1,64], index: 5, kind: input, shape index: {}]
  %s6 = inlined_call_operand.hbm [shape: bf16[32,32], index: 6, kind: input, shape index: {}]
  %s7 = inlined_call_operand.vmem [shape: f32[1,32], index: 7, kind: input, shape index: {}]
  %s8 = inlined_call_operand.vmem [shape: f32[1,32], index: 8, kind: input, shape index: {}]
  %s9 = inlined_call_operand.<no memory space> [shape: f32[1], index: 9, kind: input, shape index: {}]
  %s10 = inlined_call_operand.hbm [shape: f32[2,1,8], index: 10, kind: output, shape index: {}]
  %s11 = sld [smem:[#allocation0]]
  $region93: #{tpu_custom_call.1} parent=0
    _
  %s13 = ssub.s32 1, %s11
  %s14 = scalar_select 0, %s13, %s11
  %15 = sst [smem:[#allocation8]] %s9
  $region1: #{tpu_custom_call.1} parent=0
    #allocation9 [shape = 'u8[4096]{0}', space=vmem, size = 0x1000, scoped, tag = 'input window, operand 0']
    #allocation10 [shape = 's32[2]{0}', space=sflag, size = 0x8, scoped, tag = 'scoped memory for tpu_custom_call.1']
    #allocation11 [shape = 's32[2]{0}', space=sflag, size = 0x8, scoped, tag = 'scoped memory for tpu_custom_call.1']
    #allocation12 [shape = 'u8[4096]{0}', space=vmem, size = 0x1000, scoped, tag = 'input window, operand 1']
    #allocation13 [shape = 's32[2]{0}', space=sflag, size = 0x8, scoped, tag = 'scoped memory for tpu_custom_call.1']
    #allocation14 [shape = 'u8[8192]{0}', space=vmem, size = 0x2000, scoped, tag = 'input window, operand 2, single buffered']
    #allocation15 [shape = 'u8[8192]{0}', space=vmem, size = 0x2000, scoped, tag = 'input window, operand 3, single buffered']
    #allocation16 [shape = 's32[1]{0}', space=sflag, size = 0x4, scoped, tag = 'scoped memory for tpu_custom_call.1']
    #allocation17 [shape = 'u8[8192]{0}', space=vmem, size = 0x2000, scoped, tag = 'input window, operand 6, single buffered']
    #allocation18 [shape = 'u8[1024]{0}', space=vmem, size = 0x400, scoped, tag = 'output window, operand 0']
    %16 = vsyncpa [#allocation10], 0
    %s17 = scalar_lea.sflag [#allocation10], 1
    %18 = vsyncpa %s17, 0
    %19 = vsyncpa [#allocation13], 0
    %s20 = scalar_lea.sflag [#allocation13], 1
    %21 = vsyncpa %s20, 0
    %22 = vsyncpa [#allocation16], 0
    %23 = vsyncpa [#allocation11], 0
    %s24 = scalar_lea.sflag [#allocation11], 1
    %25 = vsyncpa %s24, 0
    loop: start=0, step=1, limit=4
    $region2: #{tpu_custom_call.1} parent=1 // loop_pre_header
      _
    $region3: #{tpu_custom_call.1} parent=1 // loop_header
      %s27 = sphi 0, %s31
      %p28 = scmp.ge.s32.totalorder %s27, 4
      %s37 = sphi 0, %s39
      %s40 = sphi 0, %s37
      %s41 = sphi 0, %s40
      %s57 = sphi 0, %s41
      %s63 = sphi 0, %s65
      %s66 = sphi 0, %s63
      %s67 = sphi 0, %s66
      %s83 = sphi 0, %s67
      %s87 = sphi 0, %s87
      %s89 = sphi 0, %s87
      %s90 = sphi 0, %s89
      %s104 = sphi 0, %s90
      %s108 = sphi 0, %s108
      %s110 = sphi 0, %s108
      %s111 = sphi 0, %s110
      %s125 = sphi 0, %s111
      %s129 = sphi 0, %s129
      %s131 = sphi 0, %s129
      %s132 = sphi 0, %s131
      %s146 = sphi 0, %s132
      %s150 = sphi 0, %s150
      %s152 = sphi 0, %s150
      %s153 = sphi 0, %s152
      %s167 = sphi 0, %s153
      %s171 = sphi 0, %s171
      %s173 = sphi 0, %s171
      %s174 = sphi 0, %s173
      %s188 = sphi 0, %s174
      %s192 = sphi 0, %s192
      %s194 = sphi 0, %s192
      %s195 = sphi 0, %s194
      %s209 = sphi 0, %s195
      %s213 = sphi 0, %s213
      %s215 = sphi 0, %s213
      %s216 = sphi 0, %s215
      %s230 = sphi 0, %s216
      %s234 = sphi 0, %s234
      %s236 = sphi 0, %s234
      %s237 = sphi 0, %s236
      %s251 = sphi 0, %s237
      %s257 = sphi 0, %s259
      %s260 = sphi 0, %s257
      %s261 = sphi 0, %s260
      %s277 = sphi 0, %s261
    $region4: #{tpu_custom_call.1} parent=1 // loop_header_branch
      %30 = sbr.rel (%p28) target = $region8
    $region5: #{tpu_custom_call.1} parent=1 // loop_body
      %s32 = ssub.s32 %s27, 1
      %s33 = ssub.s32 %s27, 2
      %s34 = sadd.s32 %s27, 1
      %s35 = ssub.s32 %s27, %s34
      %p36 = scmp.eq.s32.totalorder %s35, 0
      %s38 = sadd.s32 %s37, 1
      %s39 = scalar_select %p36, %s37, %s38
      %p42 = pneg %p36
      %p43 = scmp.eq.s32.totalorder %s27, 1
      %p44 = por %p42, %p43
      %p45 = scmp.ne.s32.totalorder %s37, %s40
      %p46 = scmp.eq.s32.totalorder %s27, 0
      %p47 = por %p45, %p46
      %p48 = scmp.ne.s32.totalorder %s37, %s40
      %p49 = scmp.eq.s32.totalorder %s32, 1
      %p50 = por %p48, %p49
      %p51 = scmp.ne.s32.totalorder %s40, %s41
      %p52 = scmp.eq.s32.totalorder %s32, 0
      %p53 = por %p51, %p52
      %p54 = scmp.ne.s32.totalorder %s40, %s41
      %p55 = scmp.eq.s32.totalorder %s33, 1
      %p56 = por %p54, %p55
      %p58 = scmp.ne.s32.totalorder %s41, %s57
      %p59 = scmp.eq.s32.totalorder %s33, 0
      %p60 = por %p58, %p59
      %s61 = ssub.s32 %s27, %s34
      %p62 = scmp.eq.s32.totalorder %s61, 0
      %s64 = sadd.s32 %s63, 1
      %s65 = scalar_select %p62, %s63, %s64
      %p68 = pneg %p62
      %p69 = scmp.eq.s32.totalorder %s27, 1
      %p70 = por %p68, %p69
      %p71 = scmp.ne.s32.totalorder %s63, %s66
      %p72 = scmp.eq.s32.totalorder %s27, 0
      %p73 = por %p71, %p72
      %p74 = scmp.ne.s32.totalorder %s63, %s66
      %p75 = scmp.eq.s32.totalorder %s32, 1
      %p76 = por %p74, %p75
      %p77 = scmp.ne.s32.totalorder %s66, %s67
      %p78 = scmp.eq.s32.totalorder %s32, 0
      %p79 = por %p77, %p78
      %p80 = scmp.ne.s32.totalorder %s66, %s67
      %p81 = scmp.eq.s32.totalorder %s33, 1
      %p82 = por %p80, %p81
      %p84 = scmp.ne.s32.totalorder %s67, %s83
      %p85 = scmp.eq.s32.totalorder %s33, 0
      %p86 = por %p84, %p85
      %s88 = sadd.s32 %s87, 1
      %p91 = scmp.eq.s32.totalorder %s27, 1
      %p92 = scmp.ne.s32.totalorder %s87, %s89
      %p93 = scmp.eq.s32.totalorder %s27, 0
      %p94 = por %p92, %p93
      %p95 = scmp.ne.s32.totalorder %s87, %s89
      %p96 = scmp.eq.s32.totalorder %s32, 1
      %p97 = por %p95, %p96
      %p98 = scmp.ne.s32.totalorder %s89, %s90
      %p99 = scmp.eq.s32.totalorder %s32, 0
      %p100 = por %p98, %p99
      %p101 = scmp.ne.s32.totalorder %s89, %s90
      %p102 = scmp.eq.s32.totalorder %s33, 1
      %p103 = por %p101, %p102
      %p105 = scmp.ne.s32.totalorder %s90, %s104
      %p106 = scmp.eq.s32.totalorder %s33, 0
      %p107 = por %p105, %p106
      %s109 = sadd.s32 %s108, 1
      %p112 = scmp.eq.s32.totalorder %s27, 1
      %p113 = scmp.ne.s32.totalorder %s108, %s110
      %p114 = scmp.eq.s32.totalorder %s27, 0
      %p115 = por %p113, %p114
      %p116 = scmp.ne.s32.totalorder %s108, %s110
      %p117 = scmp.eq.s32.totalorder %s32, 1
      %p118 = por %p116, %p117
      %p119 = scmp.ne.s32.totalorder %s110, %s111
      %p120 = scmp.eq.s32.totalorder %s32, 0
      %p121 = por %p119, %p120
      %p122 = scmp.ne.s32.totalorder %s110, %s111
      %p123 = scmp.eq.s32.totalorder %s33, 1
      %p124 = por %p122, %p123
      %p126 = scmp.ne.s32.totalorder %s111, %s125
      %p127 = scmp.eq.s32.totalorder %s33, 0
      %p128 = por %p126, %p127
      %s130 = sadd.s32 %s129, 1
      %p133 = scmp.eq.s32.totalorder %s27, 1
      %p134 = scmp.ne.s32.totalorder %s129, %s131
      %p135 = scmp.eq.s32.totalorder %s27, 0
      %p136 = por %p134, %p135
      %p137 = scmp.ne.s32.totalorder %s129, %s131
      %p138 = scmp.eq.s32.totalorder %s32, 1
      %p139 = por %p137, %p138
      %p140 = scmp.ne.s32.totalorder %s131, %s132
      %p141 = scmp.eq.s32.totalorder %s32, 0
      %p142 = por %p140, %p141
      %p143 = scmp.ne.s32.totalorder %s131, %s132
      %p144 = scmp.eq.s32.totalorder %s33, 1
      %p145 = por %p143, %p144
      %p147 = scmp.ne.s32.totalorder %s132, %s146
      %p148 = scmp.eq.s32.totalorder %s33, 0
      %p149 = por %p147, %p148
      %s151 = sadd.s32 %s150, 1
      %p154 = scmp.eq.s32.totalorder %s27, 1
      %p155 = scmp.ne.s32.totalorder %s150, %s152
      %p156 = scmp.eq.s32.totalorder %s27, 0
      %p157 = por %p155, %p156
      %p158 = scmp.ne.s32.totalorder %s150, %s152
      %p159 = scmp.eq.s32.totalorder %s32, 1
      %p160 = por %p158, %p159
      %p161 = scmp.ne.s32.totalorder %s152, %s153
      %p162 = scmp.eq.s32.totalorder %s32, 0
      %p163 = por %p161, %p162
      %p164 = scmp.ne.s32.totalorder %s152, %s153
      %p165 = scmp.eq.s32.totalorder %s33, 1
      %p166 = por %p164, %p165
      %p168 = scmp.ne.s32.totalorder %s153, %s167
      %p169 = scmp.eq.s32.totalorder %s33, 0
      %p170 = por %p168, %p169
      %s172 = sadd.s32 %s171, 1
      %p175 = scmp.eq.s32.totalorder %s27, 1
      %p176 = scmp.ne.s32.totalorder %s171, %s173
      %p177 = scmp.eq.s32.totalorder %s27, 0
      %p178 = por %p176, %p177
      %p179 = scmp.ne.s32.totalorder %s171, %s173
      %p180 = scmp.eq.s32.totalorder %s32, 1
      %p181 = por %p179, %p180
      %p182 = scmp.ne.s32.totalorder %s173, %s174
      %p183 = scmp.eq.s32.totalorder %s32, 0
      %p184 = por %p182, %p183
      %p185 = scmp.ne.s32.totalorder %s173, %s174
      %p186 = scmp.eq.s32.totalorder %s33, 1
      %p187 = por %p185, %p186
      %p189 = scmp.ne.s32.totalorder %s174, %s188
      %p190 = scmp.eq.s32.totalorder %s33, 0
      %p191 = por %p189, %p190
      %s193 = sadd.s32 %s192, 1
      %p196 = scmp.eq.s32.totalorder %s27, 1
      %p197 = scmp.ne.s32.totalorder %s192, %s194
      %p198 = scmp.eq.s32.totalorder %s27, 0
      %p199 = por %p197, %p198
      %p200 = scmp.ne.s32.totalorder %s192, %s194
      %p201 = scmp.eq.s32.totalorder %s32, 1
      %p202 = por %p200, %p201
      %p203 = scmp.ne.s32.totalorder %s194, %s195
      %p204 = scmp.eq.s32.totalorder %s32, 0
      %p205 = por %p203, %p204
      %p206 = scmp.ne.s32.totalorder %s194, %s195
      %p207 = scmp.eq.s32.totalorder %s33, 1
      %p208 = por %p206, %p207
      %p210 = scmp.ne.s32.totalorder %s195, %s209
      %p211 = scmp.eq.s32.totalorder %s33, 0
      %p212 = por %p210, %p211
      %s214 = sadd.s32 %s213, 1
      %p217 = scmp.eq.s32.totalorder %s27, 1
      %p218 = scmp.ne.s32.totalorder %s213, %s215
      %p219 = scmp.eq.s32.totalorder %s27, 0
      %p220 = por %p218, %p219
      %p221 = scmp.ne.s32.totalorder %s213, %s215
      %p222 = scmp.eq.s32.totalorder %s32, 1
      %p223 = por %p221, %p222
      %p224 = scmp.ne.s32.totalorder %s215, %s216
      %p225 = scmp.eq.s32.totalorder %s32, 0
      %p226 = por %p224, %p225
      %p227 = scmp.ne.s32.totalorder %s215, %s216
      %p228 = scmp.eq.s32.totalorder %s33, 1
      %p229 = por %p227, %p228
      %p231 = scmp.ne.s32.totalorder %s216, %s230
      %p232 = scmp.eq.s32.totalorder %s33, 0
      %p233 = por %p231, %p232
      %s235 = sadd.s32 %s234, 1
      %p238 = scmp.eq.s32.totalorder %s27, 1
      %p239 = scmp.ne.s32.totalorder %s234, %s236
      %p240 = scmp.eq.s32.totalorder %s27, 0
      %p241 = por %p239, %p240
      %p242 = scmp.ne.s32.totalorder %s234, %s236
      %p243 = scmp.eq.s32.totalorder %s32, 1
      %p244 = por %p242, %p243
      %p245 = scmp.ne.s32.totalorder %s236, %s237
      %p246 = scmp.eq.s32.totalorder %s32, 0
      %p247 = por %p245, %p246
      %p248 = scmp.ne.s32.totalorder %s236, %s237
      %p249 = scmp.eq.s32.totalorder %s33, 1
      %p250 = por %p248, %p249
      %p252 = scmp.ne.s32.totalorder %s237, %s251
      %p253 = scmp.eq.s32.totalorder %s33, 0
      %p254 = por %p252, %p253
      %s255 = ssub.s32 %s27, %s34
      %p256 = scmp.eq.s32.totalorder %s255, 0
      %s258 = sadd.s32 %s257, 1
      %s259 = scalar_select %p256, %s257, %s258
      %p262 = pneg %p256
      %p263 = scmp.eq.s32.totalorder %s27, 1
      %p264 = por %p262, %p263
      %p265 = scmp.ne.s32.totalorder %s257, %s260
      %p266 = scmp.eq.s32.totalorder %s27, 0
      %p267 = por %p265, %p266
      %p268 = scmp.ne.s32.totalorder %s257, %s260
      %p269 = scmp.eq.s32.totalorder %s32, 1
      %p270 = por %p268, %p269
      %p271 = scmp.ne.s32.totalorder %s260, %s261
      %p272 = scmp.eq.s32.totalorder %s32, 0
      %p273 = por %p271, %p272
      %p274 = scmp.ne.s32.totalorder %s260, %s261
      %p275 = scmp.eq.s32.totalorder %s33, 1
      %p276 = por %p274, %p275
      %p278 = scmp.ne.s32.totalorder %s261, %s277
      %p279 = scmp.eq.s32.totalorder %s33, 0
      %p280 = por %p278, %p279
      %p281 = scmp.le.s32.totalorder 1, %s27
      %p282 = scmp.lt.s32.totalorder %s27, 3
      %p283 = pnand %p281, %p282
      %p284 = pneg %p283
      // Predicated region
      $region9: #{tpu_custom_call.1} parent=5 // pred_check
        _
      $region10: #{tpu_custom_call.1} parent=5 // pred_check_branch
        %286 = sbr.rel (%p283) target = $region12
      $region11: #{tpu_custom_call.1} parent=5 // pred_region
        %s287 = ssub.s32 %s27, 1
        // Predicated region
        $region13: #{tpu_custom_call.1} parent=11 // pred_check
          %p288 = pneg %p100
        $region14: #{tpu_custom_call.1} parent=11 // pred_check_branch
          %290 = sbr.rel (%p288) target = $region16
        $region15: #{tpu_custom_call.1} parent=11 // pred_region
          %s292 = ssub.s32 256, 256
          %293 = vsyncadd [#allocation13], %s292
          %s294 = sshll.u32 [#allocation14], 4
          %s295 = int_to_ptr.vmem [resolvable:$true] %s294
          %300 = dma.hbm_to_vmem [thread:$0]  %s2, 256, %s295, [#allocation13], 64, 64, 4
        $region16: #{tpu_custom_call.1} parent=11 // pred_fallthru
          _
        // Predicated region
        $region17: #{tpu_custom_call.1} parent=11 // pred_check
          %p301 = pneg %p121
        $region18: #{tpu_custom_call.1} parent=11 // pred_check_branch
          %303 = sbr.rel (%p301) target = $region20
        $region19: #{tpu_custom_call.1} parent=11 // pred_region
          %s305 = ssub.s32 256, 256
          %306 = vsyncadd [#allocation16], %s305
          %s307 = sshll.u32 [#allocation15], 4
          %s308 = int_to_ptr.vmem [resolvable:$true] %s307
          %313 = dma.hbm_to_vmem [thread:$0]  %s3, 256, %s308, [#allocation16], 128, 128, 8
        $region20: #{tpu_custom_call.1} parent=11 // pred_fallthru
          _
        // Predicated region
        $region21: #{tpu_custom_call.1} parent=11 // pred_check
          %p314 = pneg %p142
        $region22: #{tpu_custom_call.1} parent=11 // pred_check_branch
          %316 = sbr.rel (%p314) target = $region24
        $region23: #{tpu_custom_call.1} parent=11 // pred_region
          _
        $region24: #{tpu_custom_call.1} parent=11 // pred_fallthru
          _
        // Predicated region
        $region25: #{tpu_custom_call.1} parent=11 // pred_check
          %p317 = pneg %p163
        $region26: #{tpu_custom_call.1} parent=11 // pred_check_branch
          %319 = sbr.rel (%p317) target = $region28
        $region27: #{tpu_custom_call.1} parent=11 // pred_region
          _
        $region28: #{tpu_custom_call.1} parent=11 // pred_fallthru
          _
        // Predicated region
        $region29: #{tpu_custom_call.1} parent=11 // pred_check
          %p320 = pneg %p184
        $region30: #{tpu_custom_call.1} parent=11 // pred_check_branch
          %322 = sbr.rel (%p320) target = $region32
        $region31: #{tpu_custom_call.1} parent=11 // pred_region
          %s324 = ssub.s32 256, 256
          %325 = vsyncadd [#allocation16], %s324
          %s326 = sshll.u32 [#allocation17], 4
          %s327 = int_to_ptr.vmem [resolvable:$true] %s326
          %332 = dma.hbm_to_vmem [thread:$0]  %s6, 256, %s327, [#allocation16], 64, 64, 4
        $region32: #{tpu_custom_call.1} parent=11 // pred_fallthru
          _
        // Predicated region
        $region33: #{tpu_custom_call.1} parent=11 // pred_check
          %p333 = pneg %p205
        $region34: #{tpu_custom_call.1} parent=11 // pred_check_branch
          %335 = sbr.rel (%p333) target = $region36
        $region35: #{tpu_custom_call.1} parent=11 // pred_region
          _
        $region36: #{tpu_custom_call.1} parent=11 // pred_fallthru
          _
        // Predicated region
        $region37: #{tpu_custom_call.1} parent=11 // pred_check
          %p336 = pneg %p226
        $region38: #{tpu_custom_call.1} parent=11 // pred_check_branch
          %338 = sbr.rel (%p336) target = $region40
        $region39: #{tpu_custom_call.1} parent=11 // pred_region
          _
        $region40: #{tpu_custom_call.1} parent=11 // pred_fallthru
          _
        // Predicated region
        $region41: #{tpu_custom_call.1} parent=11 // pred_check
          %p339 = pneg %p247
        $region42: #{tpu_custom_call.1} parent=11 // pred_check_branch
          %341 = sbr.rel (%p339) target = $region44
        $region43: #{tpu_custom_call.1} parent=11 // pred_region
          _
        $region44: #{tpu_custom_call.1} parent=11 // pred_fallthru
          _
      $region12: #{tpu_custom_call.1} parent=5 // pred_fallthru
        _
      %p342 = scmp.lt.s32.totalorder %s27, 2
      // Predicated region
      $region45: #{tpu_custom_call.1} parent=5 // pred_check
        %p343 = pneg %p342
      $region46: #{tpu_custom_call.1} parent=5 // pred_check_branch
        %345 = sbr.rel (%p343) target = $region48
      $region47: #{tpu_custom_call.1} parent=5 // pred_region
        // Predicated region
        $region49: #{tpu_custom_call.1} parent=47 // pred_check
          %p346 = pneg %p47
        $region50: #{tpu_custom_call.1} parent=47 // pred_check_branch
          %348 = sbr.rel (%p346) target = $region52
        $region51: #{tpu_custom_call.1} parent=47 // pred_region
          %s349 = sand.u32 %s37, 1
          %s350 = scalar_lea.sflag [#allocation10], %s349
          %s351 = sand.u32 %s37, 1
          %s352 = smul.addr %s351, 4
          %s353 = scalar_lea.vmem [#allocation9], %s352
          %s355 = ssub.s32 64, 64
          %356 = vsyncadd %s350, %s355
          %s357 = smul.addr %s27, 64
          %s358 = scalar_lea.hbm %s0, %s357
          %s360 = sshll.u32 %s353, 4
          %s361 = int_to_ptr.vmem [resolvable:$true] %s360
          %363 = dma.hbm_to_vmem [thread:$0]  %s358, 64, %s361, %s350
        $region52: #{tpu_custom_call.1} parent=47 // pred_fallthru
          _
        // Predicated region
        $region53: #{tpu_custom_call.1} parent=47 // pred_check
          %p364 = pneg %p73
        $region54: #{tpu_custom_call.1} parent=47 // pred_check_branch
          %366 = sbr.rel (%p364) target = $region56
        $region55: #{tpu_custom_call.1} parent=47 // pred_region
          %s367 = sand.u32 %s27, 1
          %s368 = scalar_lea.sflag [#allocation13], %s367
          %s369 = sand.u32 %s63, 1
          %s370 = smul.addr %s369, 4
          %s371 = scalar_lea.vmem [#allocation12], %s370
          %s373 = ssub.s32 64, 64
          %374 = vsyncadd %s368, %s373
          %s375 = smul.addr %s27, 64
          %s376 = scalar_lea.hbm %s1, %s375
          %s378 = sshll.u32 %s371, 4
          %s379 = int_to_ptr.vmem [resolvable:$true] %s378
          %381 = dma.hbm_to_vmem [thread:$0]  %s376, 64, %s379, %s368
        $region56: #{tpu_custom_call.1} parent=47 // pred_fallthru
          _
      $region48: #{tpu_custom_call.1} parent=5 // pred_fallthru
        _
      %p382 = scmp.le.s32.totalorder 1, %s27
      %p383 = scmp.lt.s32.totalorder %s27, 3
      %p384 = pnand %p382, %p383
      %p385 = pneg %p384
      // Predicated region
      $region57: #{tpu_custom_call.1} parent=5 // pred_check
        _
      $region58: #{tpu_custom_call.1} parent=5 // pred_check_branch
        %387 = sbr.rel (%p384) target = $region60
      $region59: #{tpu_custom_call.1} parent=5 // pred_region
        %s388 = ssub.s32 %s27, 1
        %s389 = sand.u32 %s40, 1
        %s390 = scalar_lea.sflag [#allocation10], %s389
        %s391 = sand.u32 %s40, 1
        %s392 = smul.addr %s391, 4
        %s393 = scalar_lea.vmem [#allocation9], %s392
        // Predicated region
        $region61: #{tpu_custom_call.1} parent=59 // pred_check
          %p394 = pneg %p53
        $region62: #{tpu_custom_call.1} parent=59 // pred_check_branch
          %396 = sbr.rel (%p394) target = $region64
        $region63: #{tpu_custom_call.1} parent=59 // pred_region
          %397 = dma.done %s390, 64
        $region64: #{tpu_custom_call.1} parent=59 // pred_fallthru
          _
        %s398 = sand.u32 %s32, 1
        %s399 = scalar_lea.sflag [#allocation13], %s398
        %s400 = sand.u32 %s66, 1
        %s401 = smul.addr %s400, 4
        %s402 = scalar_lea.vmem [#allocation12], %s401
        // Predicated region
        $region65: #{tpu_custom_call.1} parent=59 // pred_check
          %p403 = pneg %p79
        $region66: #{tpu_custom_call.1} parent=59 // pred_check_branch
          %405 = sbr.rel (%p403) target = $region68
        $region67: #{tpu_custom_call.1} parent=59 // pred_region
          %406 = dma.done %s399, 64
        $region68: #{tpu_custom_call.1} parent=59 // pred_fallthru
          _
        // Predicated region
        $region69: #{tpu_custom_call.1} parent=59 // pred_check
          %p407 = pneg %p100
        $region70: #{tpu_custom_call.1} parent=59 // pred_check_branch
          %409 = sbr.rel (%p407) target = $region72
        $region71: #{tpu_custom_call.1} parent=59 // pred_region
          %410 = dma.done [#allocation13], 256
        $region72: #{tpu_custom_call.1} parent=59 // pred_fallthru
          _
        // Predicated region
        $region73: #{tpu_custom_call.1} parent=59 // pred_check
          %p411 = pneg %p121
        $region74: #{tpu_custom_call.1} parent=59 // pred_check_branch
          %413 = sbr.rel (%p411) target = $region76
        $region75: #{tpu_custom_call.1} parent=59 // pred_region
          %414 = dma.done [#allocation16], 256
        $region76: #{tpu_custom_call.1} parent=59 // pred_fallthru
          _
        // Predicated region
        $region77: #{tpu_custom_call.1} parent=59 // pred_check
          %p415 = pneg %p184
        $region78: #{tpu_custom_call.1} parent=59 // pred_check_branch
          %417 = sbr.rel (%p415) target = $region80
        $region79: #{tpu_custom_call.1} parent=59 // pred_region
          %418 = dma.done [#allocation16], 256
        $region80: #{tpu_custom_call.1} parent=59 // pred_fallthru
          _
        %s419 = sand.u32 %s40, 1
        %s420 = scalar_lea.sflag [#allocation10], %s419
        %s421 = sand.u32 %s40, 1
        %s422 = smul.addr %s421, 4
        %s423 = scalar_lea.vmem [#allocation9], %s422
        %p424 = pneg %p53
        %p425 = pneg %p50
        %s426 = sand.u32 %s32, 1
        %s427 = scalar_lea.sflag [#allocation13], %s426
        %s428 = sand.u32 %s66, 1
        %s429 = smul.addr %s428, 4
        %s430 = scalar_lea.vmem [#allocation12], %s429
        %p431 = pneg %p79
        %p432 = pneg %p76
        %p433 = pneg %p100
        %p434 = pneg %p97
        %p435 = pneg %p121
        %p436 = pneg %p118
        %p437 = pneg %p142
        %p438 = pneg %p139
        %p439 = pneg %p163
        %p440 = pneg %p160
        %p441 = pneg %p184
        %p442 = pneg %p181
        %p443 = pneg %p205
        %p444 = pneg %p202
        %p445 = pneg %p226
        %p446 = pneg %p223
        %p447 = pneg %p247
        %p448 = pneg %p244
        %p449 = pneg %p273
        %p450 = pneg %p270
        %s451 = sand.u32 %s260, 1
        %s452 = scalar_lea.sflag [#allocation11], %s451
        %s453 = sand.u32 %s260, 1
        %s454 = scalar_lea.vmem [#allocation18], %s453
        %v456 = vld [vmem:[%s393] sm:$0xf]
        %v457 = vld [vmem:[%s402] sm:$0xf]
        %v458 = vld [vmem:[#allocation14] sm:$0xf]
        %v459 = vld [vmem:[#allocation14 + $0x4] sm:$0xf]
        %v460 = vld [vmem:[#allocation14 + $0x8] sm:$0xf]
        %v461 = vld [vmem:[#allocation14 + $0xc] sm:$0xf]
        %v466 = vunpack.c.l.b16 %v458
        %v467 = vunpack.c.l.b16 %v459
        %v468 = vunpack.c.l.b16 %v460
        %v469 = vunpack.c.l.b16 %v461
        %v470 = vpack.c.b16 %v467, %v466
        %v471 = vpack.c.b16 %v469, %v468
        %vm474 = vcmask 261120
        %v476 = vsel %vm474, %v456, 0
        %478 = vmatprep.subr.bf16.mxu0 0
        %479 = vmatpush1.bf16.msra.mxu0 %v470
        %480 = vmatprep.subr.bf16.mxu0 0
        %481 = vmatpush1.bf16.msra.mxu0 %v471
        %482 = vmatprep.subr.bf16.mxu0 0
        %483 = vmatpush1.bf16.msra.mxu0 0
        %484 = vmatprep.subr.bf16.mxu0 0
        %485 = vmatpush1.bf16.msra.mxu0 0
        %486 = vmatprep.subr.bf16.mxu0 0
        %487 = vmatpush1.bf16.msra.mxu0 0
        %488 = vmatprep.subr.bf16.mxu0 0
        %489 = vmatpush1.bf16.msra.mxu0 0
        %490 = vmatprep.subr.bf16.mxu0 0
        %491 = vmatpush1.bf16.msra.mxu0 0
        %492 = vmatprep.subr.bf16.mxu0 0
        %493 = vmatpush1.bf16.msra.mxu0 0
        %494 = vmatprep.subr.bf16.mxu0 0
        %495 = vmatpush1.bf16.msra.mxu0 0
        %496 = vmatprep.subr.bf16.mxu0 0
        %497 = vmatpush1.bf16.msra.mxu0 0
        %498 = vmatprep.subr.bf16.mxu0 0
        %499 = vmatpush1.bf16.msra.mxu0 0
        %500 = vmatprep.subr.bf16.mxu0 0
        %501 = vmatpush1.bf16.msra.mxu0 0
        %502 = vmatprep.subr.bf16.mxu0 0
        %503 = vmatpush1.bf16.msra.mxu0 0
        %504 = vmatprep.subr.bf16.mxu0 0
        %505 = vmatpush1.bf16.msra.mxu0 0
        %506 = vmatprep.subr.bf16.mxu0 0
        %507 = vmatpush1.bf16.msra.mxu0 0
        %508 = vmatprep.subr.bf16.mxu0 0
        %509 = vmatpush1.bf16.msra.mxu0 0
        %510 = vmatprep.mubr.bf16.mxu0 0
        %511 = vmatmul.mubr.bf16.gmra.mrb[0].mxu0 %v476
        %v512 = vpop.f32.mrb[0].mxu0
        %v513 = vadd.f32 0.0, %v512
        %v514 = vpop.f32.mrb[0].mxu0
        %v515 = vpop.f32.mrb[0].mxu0
        %v516 = vpop.f32.mrb[0].mxu0
        %517 = vdwg.mxu0
        %518 = vst.msk [vmem:[#allocation6] sm:$0xff] %vm474, %v513
        %vm519 = vcmask 392448
        %v520 = vsel %vm519, %v513, -inf
        %521 = vmax.xlane.f32.xlu0 %v520
        %v522 = vpop.xlane.xlu0 %521
        %v523 = vsub.f32 %v513, %v522
        %v524 = vmul.f32 %v523, 1.442695
        %v525 = vpow.pop %v524
        %527 = vrot.lane.b32.xlu0 %v525, 96
        %v528 = vpop.permute.xlu0 %527
        %vm530 = vcmask 130048
        %v531 = vsel %vm530, %v528, 0.0
        %532 = vadd.xlane.f32.xlu0 %v531
        %v533 = vpop.xlane.xlu0 %532
        %v534 = vrcp.pop %v533
        %v535 = vmul.f32 %v525, %v534
        %537 = vrot.lane.b32.xlu0 %v535, 96
        %v538 = vpop.permute.xlu0 %537
        %540 = vxpose.xlu0.b32.start [1/16] %v538, 128
        %541 = vxpose.xlu0.b32.cont [2/16] 0.0, 128
        %542 = vxpose.xlu0.b32.cont [3/16] 0.0, 128
        %543 = vxpose.xlu0.b32.cont [4/16] 0.0, 128
        %544 = vxpose.xlu0.b32.cont [5/16] 0.0, 128
        %545 = vxpose.xlu0.b32.cont [6/16] 0.0, 128
        %546 = vxpose.xlu0.b32.cont [7/16] 0.0, 128
        %547 = vxpose.xlu0.b32.cont [8/16] 0.0, 128
        %548 = vxpose.xlu0.b32.cont [9/16] 0.0, 128
        %549 = vxpose.xlu0.b32.cont [10/16] 0.0, 128
        %550 = vxpose.xlu0.b32.cont [11/16] 0.0, 128
        %551 = vxpose.xlu0.b32.cont [12/16] 0.0, 128
        %552 = vxpose.xlu0.b32.cont [13/16] 0.0, 128
        %553 = vxpose.xlu0.b32.cont [14/16] 0.0, 128
        %554 = vxpose.xlu0.b32.cont [15/16] 0.0, 128
        %555 = vxpose.xlu0.b32.end [16/16] 0.0, 128
        %v556 = vpop.trf.xlu0
        %v557 = vpop.trf.xlu0
        %v558 = vpop.trf.xlu0
        %v559 = vpop.trf.xlu0
        %v560 = vpop.trf.xlu0
        %v561 = vpop.trf.xlu0
        %v562 = vpop.trf.xlu0
        %v563 = vpop.trf.xlu0
        %v564 = vpop.trf.xlu0
        %v565 = vpop.trf.xlu0
        %v566 = vpop.trf.xlu0
        %v567 = vpop.trf.xlu0
        %v568 = vpop.trf.xlu0
        %v569 = vpop.trf.xlu0
        %v570 = vpop.trf.xlu0
        %v571 = vpop.trf.xlu0
        %vm572 = vcmask 64512
        %573 = vst.msk [vmem:[#allocation2] sm:$0xff] %vm572, %v556
        %574 = vst.msk [vmem:[#allocation2 + $0x8] sm:$0xff] %vm572, %v557
        %v575 = vld [vmem:[%s4] sm:$0xf]
        %v576 = vld [vmem:[%s4 + $0x4] sm:$0xf]
        %v577 = vld [vmem:[%s4 + $0x8] sm:$0xf]
        %v578 = vld [vmem:[%s4 + $0xc] sm:$0xf]
        %v579 = vld [vmem:[%s5] sm:$0x1]
        %v581 = vlaneseq
        %v582 = vshrl.u32 %v581, 7
        %v583 = vsub.s32 0, %v582
        %v584 = vrot.slane %v579, %v583
        %v590 = vunpack.c.l.b16 %v575
        %v591 = vunpack.c.l.b16 %v576
        %v592 = vunpack.c.l.b16 %v577
        %v593 = vunpack.c.l.b16 %v578
        %v594 = vpack.c.b16 %v591, %v590
        %v595 = vpack.c.b16 %v593, %v592
        %v599 = vsel %vm474, %v457, 0
        %601 = vmatprep.subr.bf16.mxu0 0
        %602 = vmatpush1.bf16.msra.mxu0 %v594
        %603 = vmatprep.subr.bf16.mxu0 0
        %604 = vmatpush1.bf16.msra.mxu0 %v595
        %605 = vmatprep.subr.bf16.mxu0 0
        %606 = vmatpush1.bf16.msra.mxu0 0
        %607 = vmatprep.subr.bf16.mxu0 0
        %608 = vmatpush1.bf16.msra.mxu0 0
        %609 = vmatprep.subr.bf16.mxu0 0
        %610 = vmatpush1.bf16.msra.mxu0 0
        %611 = vmatprep.subr.bf16.mxu0 0
        %612 = vmatpush1.bf16.msra.mxu0 0
        %613 = vmatprep.subr.bf16.mxu0 0
        %614 = vmatpush1.bf16.msra.mxu0 0
        %615 = vmatprep.subr.bf16.mxu0 0
        %616 = vmatpush1.bf16.msra.mxu0 0
        %617 = vmatprep.subr.bf16.mxu0 0
        %618 = vmatpush1.bf16.msra.mxu0 0
        %619 = vmatprep.subr.bf16.mxu0 0
        %620 = vmatpush1.bf16.msra.mxu0 0
        %621 = vmatprep.subr.bf16.mxu0 0
        %622 = vmatpush1.bf16.msra.mxu0 0
        %623 = vmatprep.subr.bf16.mxu0 0
        %624 = vmatpush1.bf16.msra.mxu0 0
        %625 = vmatprep.subr.bf16.mxu0 0
        %626 = vmatpush1.bf16.msra.mxu0 0
        %627 = vmatprep.subr.bf16.mxu0 0
        %628 = vmatpush1.bf16.msra.mxu0 0
        %629 = vmatprep.subr.bf16.mxu0 0
        %630 = vmatpush1.bf16.msra.mxu0 0
        %631 = vmatprep.subr.bf16.mxu0 0
        %632 = vmatpush1.bf16.msra.mxu0 0
        %633 = vmatprep.mubr.bf16.mxu0 0
        %634 = vmatmul.mubr.bf16.gmra.mrb[0].mxu0 %v599
        %v635 = vpop.f32.mrb[0].mxu0
        %v636 = vadd.f32 %v584, %v635
        %v637 = vpop.f32.mrb[0].mxu0
        %v638 = vpop.f32.mrb[0].mxu0
        %v639 = vpop.f32.mrb[0].mxu0
        %640 = vdwg.mxu0
        %v641 = vxor.u32 %v636, 2147483648
        %v642 = vmul.f32 %v641, 1.442695
        %v643 = vpow.pop %v642
        %v644 = vadd.f32 %v643, 1.0
        %v645 = vrcp.pop %v644
        %v646 = vmul.f32 1.0, %v645
        %647 = vst.msk [vmem:[#allocation3] sm:$0xff] %vm474, %v646
        %v648 = vtanh.pop %v636
        %650 = vrot.lane.b32.xlu0 %v648, 96
        %v651 = vpop.permute.xlu0 %650
        %653 = vst.msk [vmem:[#allocation4] sm:$0xff] %vm474, %v651
        %v654 = vld [vmem:[#allocation15] sm:$0xff]
        %v655 = vld [vmem:[#allocation15 + $0x8] sm:$0xff]
        %656 = vst.msk [vmem:[#allocation7] sm:$0xff] %vm474, %v654
        %657 = vst.msk [vmem:[#allocation7 + $0x8] sm:$0xff] %vm474, %v655
        %v658 = vld [vmem:[#allocation2] sm:$0xff]
        %v659 = vld [vmem:[#allocation2 + $0x8] sm:$0xff]
        %v660 = vld [vmem:[#allocation3] sm:$0x1]
        %v661 = vld [vmem:[#allocation4] sm:$0x1]
        %v662 = vld [vmem:[#allocation7] sm:$0xff]
        %v663 = vld [vmem:[#allocation7 + $0x8] sm:$0xff]
        %665 = vset.pattern.permute.xlu0 0
        %666 = vperm.xlu0 %665, %v658
        %v667 = vpop.permute.xlu0 %666
        %670 = vset.pattern.permute.xlu0 0
        %671 = vperm.xlu0 %670, %v659
        %v672 = vpop.permute.xlu0 %671
        %v674 = vmul.f32 %v667, %v662
        %v675 = vmul.f32 %v672, %v663
        %v676 = vsel %vm474, %v674, 0.0
        %v677 = vsel %vm474, %v675, 0.0
        %v678 = vadd.f32 %v676, %v677
        %v679 = vrot.slane %v678, 4
        %v680 = vadd.f32 %v678, %v679
        %v681 = vrot.slane %v680, 2
        %v682 = vadd.f32 %v680, %v681
        %v683 = vrot.slane %v682, 1
        %v684 = vadd.f32 %v682, %v683
        %vm685 = vcmask 253952
        %686 = vst.msk [vmem:[#allocation5] sm:$0x1] %vm685, %v684
        %v687 = vlaneseq
        %v688 = vshrl.u32 %v687, 7
        %v689 = vsub.s32 0, %v688
        %v690 = vrot.slane %v660, %v689
        %v691 = vmul.f32 %v674, %v690
        %v692 = vmul.f32 %v675, %v690
        %v693 = vsub.f32 %v662, %v691
        %v694 = vsub.f32 %v663, %v692
        %v695 = vlaneseq
        %v696 = vshrl.u32 %v695, 7
        %v697 = vsub.s32 0, %v696
        %v698 = vrot.slane %v661, %v697
        %v699 = vmul.f32 %v667, %v698
        %v700 = vmul.f32 %v672, %v698
        %v701 = vadd.f32 %v693, %v699
        %v702 = vadd.f32 %v694, %v700
        %703 = vst.msk [vmem:[#allocation7] sm:$0xff] %vm474, %v701
        %704 = vst.msk [vmem:[#allocation7 + $0x8] sm:$0xff] %vm474, %v702
        %v705 = vld [vmem:[#allocation2] sm:$0xff]
        %v706 = vld [vmem:[#allocation2 + $0x8] sm:$0xff]
        %v707 = vld [vmem:[#allocation3 + $0x1] sm:$0x1]
        %v708 = vld [vmem:[#allocation4 + $0x1] sm:$0x1]
        %v709 = vld [vmem:[#allocation7] sm:$0xff]
        %v710 = vld [vmem:[#allocation7 + $0x8] sm:$0xff]
        %712 = vset.pattern.permute.xlu0 1
        %713 = vperm.xlu0 %712, %v705
        %v714 = vpop.permute.xlu0 %713
        %717 = vset.pattern.permute.xlu0 1
        %718 = vperm.xlu0 %717, %v706
        %v719 = vpop.permute.xlu0 %718
        %v721 = vmul.f32 %v714, %v709
        %v722 = vmul.f32 %v719, %v710
        %v723 = vsel %vm474, %v721, 0.0
        %v724 = vsel %vm474, %v722, 0.0
        %v725 = vadd.f32 %v723, %v724
        %v726 = vrot.slane %v725, 4
        %v727 = vadd.f32 %v725, %v726
        %v728 = vrot.slane %v727, 2
        %v729 = vadd.f32 %v727, %v728
        %v730 = vrot.slane %v729, 1
        %v731 = vadd.f32 %v729, %v730
        %732 = vst.msk [vmem:[#allocation5 + $0x1] sm:$0x1] %vm685, %v731
        %v733 = vlaneseq
        %v734 = vshrl.u32 %v733, 7
        %v735 = vsub.s32 0, %v734
        %v736 = vrot.slane %v707, %v735
        %v737 = vmul.f32 %v721, %v736
        %v738 = vmul.f32 %v722, %v736
        %v739 = vsub.f32 %v709, %v737
        %v740 = vsub.f32 %v710, %v738
        %v741 = vlaneseq
        %v742 = vshrl.u32 %v741, 7
        %v743 = vsub.s32 0, %v742
        %v744 = vrot.slane %v708, %v743
        %v745 = vmul.f32 %v714, %v744
        %v746 = vmul.f32 %v719, %v744
        %v747 = vadd.f32 %v739, %v745
        %v748 = vadd.f32 %v740, %v746
        %749 = vst.msk [vmem:[#allocation7] sm:$0xff] %vm474, %v747
        %750 = vst.msk [vmem:[#allocation7 + $0x8] sm:$0xff] %vm474, %v748
        %v751 = vld [vmem:[#allocation2] sm:$0xff]
        %v752 = vld [vmem:[#allocation2 + $0x8] sm:$0xff]
        %v753 = vld [vmem:[#allocation3 + $0x2] sm:$0x1]
        %v754 = vld [vmem:[#allocation4 + $0x2] sm:$0x1]
        %v755 = vld [vmem:[#allocation7] sm:$0xff]
        %v756 = vld [vmem:[#allocation7 + $0x8] sm:$0xff]
        %758 = vset.pattern.permute.xlu0 2
        %759 = vperm.xlu0 %758, %v751
        %v760 = vpop.permute.xlu0 %759
        %763 = vset.pattern.permute.xlu0 2
        %764 = vperm.xlu0 %763, %v752
        %v765 = vpop.permute.xlu0 %764
        %v767 = vmul.f32 %v760, %v755
        %v768 = vmul.f32 %v765, %v756
        %v769 = vsel %vm474, %v767, 0.0
        %v770 = vsel %vm474, %v768, 0.0
        %v771 = vadd.f32 %v769, %v770
        %v772 = vrot.slane %v771, 4
        %v773 = vadd.f32 %v771, %v772
        %v774 = vrot.slane %v773, 2
        %v775 = vadd.f32 %v773, %v774
        %v776 = vrot.slane %v775, 1
        %v777 = vadd.f32 %v775, %v776
        %778 = vst.msk [vmem:[#allocation5 + $0x2] sm:$0x1] %vm685, %v777
        %v779 = vlaneseq
        %v780 = vshrl.u32 %v779, 7
        %v781 = vsub.s32 0, %v780
        %v782 = vrot.slane %v753, %v781
        %v783 = vmul.f32 %v767, %v782
        %v784 = vmul.f32 %v768, %v782
        %v785 = vsub.f32 %v755, %v783
        %v786 = vsub.f32 %v756, %v784
        %v787 = vlaneseq
        %v788 = vshrl.u32 %v787, 7
        %v789 = vsub.s32 0, %v788
        %v790 = vrot.slane %v754, %v789
        %v791 = vmul.f32 %v760, %v790
        %v792 = vmul.f32 %v765, %v790
        %v793 = vadd.f32 %v785, %v791
        %v794 = vadd.f32 %v786, %v792
        %795 = vst.msk [vmem:[#allocation7] sm:$0xff] %vm474, %v793
        %796 = vst.msk [vmem:[#allocation7 + $0x8] sm:$0xff] %vm474, %v794
        %v797 = vld [vmem:[#allocation2] sm:$0xff]
        %v798 = vld [vmem:[#allocation2 + $0x8] sm:$0xff]
        %v799 = vld [vmem:[#allocation3 + $0x3] sm:$0x1]
        %v800 = vld [vmem:[#allocation4 + $0x3] sm:$0x1]
        %v801 = vld [vmem:[#allocation7] sm:$0xff]
        %v802 = vld [vmem:[#allocation7 + $0x8] sm:$0xff]
        %804 = vset.pattern.permute.xlu0 3
        %805 = vperm.xlu0 %804, %v797
        %v806 = vpop.permute.xlu0 %805
        %809 = vset.pattern.permute.xlu0 3
        %810 = vperm.xlu0 %809, %v798
        %v811 = vpop.permute.xlu0 %810
        %v813 = vmul.f32 %v806, %v801
        %v814 = vmul.f32 %v811, %v802
        %v815 = vsel %vm474, %v813, 0.0
        %v816 = vsel %vm474, %v814, 0.0
        %v817 = vadd.f32 %v815, %v816
        %v818 = vrot.slane %v817, 4
        %v819 = vadd.f32 %v817, %v818
        %v820 = vrot.slane %v819, 2
        %v821 = vadd.f32 %v819, %v820
        %v822 = vrot.slane %v821, 1
        %v823 = vadd.f32 %v821, %v822
        %824 = vst.msk [vmem:[#allocation5 + $0x3] sm:$0x1] %vm685, %v823
        %v825 = vlaneseq
        %v826 = vshrl.u32 %v825, 7
        %v827 = vsub.s32 0, %v826
        %v828 = vrot.slane %v799, %v827
        %v829 = vmul.f32 %v813, %v828
        %v830 = vmul.f32 %v814, %v828
        %v831 = vsub.f32 %v801, %v829
        %v832 = vsub.f32 %v802, %v830
        %v833 = vlaneseq
        %v834 = vshrl.u32 %v833, 7
        %v835 = vsub.s32 0, %v834
        %v836 = vrot.slane %v800, %v835
        %v837 = vmul.f32 %v806, %v836
        %v838 = vmul.f32 %v811, %v836
        %v839 = vadd.f32 %v831, %v837
        %v840 = vadd.f32 %v832, %v838
        %841 = vst.msk [vmem:[#allocation7] sm:$0xff] %vm474, %v839
        %842 = vst.msk [vmem:[#allocation7 + $0x8] sm:$0xff] %vm474, %v840
        %v843 = vld [vmem:[#allocation2] sm:$0xff]
        %v844 = vld [vmem:[#allocation2 + $0x8] sm:$0xff]
        %v845 = vld [vmem:[#allocation3 + $0x4] sm:$0x1]
        %v846 = vld [vmem:[#allocation4 + $0x4] sm:$0x1]
        %v847 = vld [vmem:[#allocation7] sm:$0xff]
        %v848 = vld [vmem:[#allocation7 + $0x8] sm:$0xff]
        %850 = vset.pattern.permute.xlu0 4
        %851 = vperm.xlu0 %850, %v843
        %v852 = vpop.permute.xlu0 %851
        %855 = vset.pattern.permute.xlu0 4
        %856 = vperm.xlu0 %855, %v844
        %v857 = vpop.permute.xlu0 %856
        %v859 = vmul.f32 %v852, %v847
        %v860 = vmul.f32 %v857, %v848
        %v861 = vsel %vm474, %v859, 0.0
        %v862 = vsel %vm474, %v860, 0.0
        %v863 = vadd.f32 %v861, %v862
        %v864 = vrot.slane %v863, 4
        %v865 = vadd.f32 %v863, %v864
        %v866 = vrot.slane %v865, 2
        %v867 = vadd.f32 %v865, %v866
        %v868 = vrot.slane %v867, 1
        %v869 = vadd.f32 %v867, %v868
        %870 = vst.msk [vmem:[#allocation5 + $0x4] sm:$0x1] %vm685, %v869
        %v871 = vlaneseq
        %v872 = vshrl.u32 %v871, 7
        %v873 = vsub.s32 0, %v872
        %v874 = vrot.slane %v845, %v873
        %v875 = vmul.f32 %v859, %v874
        %v876 = vmul.f32 %v860, %v874
        %v877 = vsub.f32 %v847, %v875
        %v878 = vsub.f32 %v848, %v876
        %v879 = vlaneseq
        %v880 = vshrl.u32 %v879, 7
        %v881 = vsub.s32 0, %v880
        %v882 = vrot.slane %v846, %v881
        %v883 = vmul.f32 %v852, %v882
        %v884 = vmul.f32 %v857, %v882
        %v885 = vadd.f32 %v877, %v883
        %v886 = vadd.f32 %v878, %v884
        %887 = vst.msk [vmem:[#allocation7] sm:$0xff] %vm474, %v885
        %888 = vst.msk [vmem:[#allocation7 + $0x8] sm:$0xff] %vm474, %v886
        %v889 = vld [vmem:[#allocation2] sm:$0xff]
        %v890 = vld [vmem:[#allocation2 + $0x8] sm:$0xff]
        %v891 = vld [vmem:[#allocation3 + $0x5] sm:$0x1]
        %v892 = vld [vmem:[#allocation4 + $0x5] sm:$0x1]
        %v893 = vld [vmem:[#allocation7] sm:$0xff]
        %v894 = vld [vmem:[#allocation7 + $0x8] sm:$0xff]
        %896 = vset.pattern.permute.xlu0 5
        %897 = vperm.xlu0 %896, %v889
        %v898 = vpop.permute.xlu0 %897
        %901 = vset.pattern.permute.xlu0 5
        %902 = vperm.xlu0 %901, %v890
        %v903 = vpop.permute.xlu0 %902
        %v905 = vmul.f32 %v898, %v893
        %v906 = vmul.f32 %v903, %v894
        %v907 = vsel %vm474, %v905, 0.0
        %v908 = vsel %vm474, %v906, 0.0
        %v909 = vadd.f32 %v907, %v908
        %v910 = vrot.slane %v909, 4
        %v911 = vadd.f32 %v909, %v910
        %v912 = vrot.slane %v911, 2
        %v913 = vadd.f32 %v911, %v912
        %v914 = vrot.slane %v913, 1
        %v915 = vadd.f32 %v913, %v914
        %916 = vst.msk [vmem:[#allocation5 + $0x5] sm:$0x1] %vm685, %v915
        %v917 = vlaneseq
        %v918 = vshrl.u32 %v917, 7
        %v919 = vsub.s32 0, %v918
        %v920 = vrot.slane %v891, %v919
        %v921 = vmul.f32 %v905, %v920
        %v922 = vmul.f32 %v906, %v920
        %v923 = vsub.f32 %v893, %v921
        %v924 = vsub.f32 %v894, %v922
        %v925 = vlaneseq
        %v926 = vshrl.u32 %v925, 7
        %v927 = vsub.s32 0, %v926
        %v928 = vrot.slane %v892, %v927
        %v929 = vmul.f32 %v898, %v928
        %v930 = vmul.f32 %v903, %v928
        %v931 = vadd.f32 %v923, %v929
        %v932 = vadd.f32 %v924, %v930
        %933 = vst.msk [vmem:[#allocation7] sm:$0xff] %vm474, %v931
        %934 = vst.msk [vmem:[#allocation7 + $0x8] sm:$0xff] %vm474, %v932
        %v935 = vld [vmem:[#allocation2] sm:$0xff]
        %v936 = vld [vmem:[#allocation2 + $0x8] sm:$0xff]
        %v937 = vld [vmem:[#allocation3 + $0x6] sm:$0x1]
        %v938 = vld [vmem:[#allocation4 + $0x6] sm:$0x1]
        %v939 = vld [vmem:[#allocation7] sm:$0xff]
        %v940 = vld [vmem:[#allocation7 + $0x8] sm:$0xff]
        %942 = vset.pattern.permute.xlu0 6
        %943 = vperm.xlu0 %942, %v935
        %v944 = vpop.permute.xlu0 %943
        %947 = vset.pattern.permute.xlu0 6
        %948 = vperm.xlu0 %947, %v936
        %v949 = vpop.permute.xlu0 %948
        %v951 = vmul.f32 %v944, %v939
        %v952 = vmul.f32 %v949, %v940
        %v953 = vsel %vm474, %v951, 0.0
        %v954 = vsel %vm474, %v952, 0.0
        %v955 = vadd.f32 %v953, %v954
        %v956 = vrot.slane %v955, 4
        %v957 = vadd.f32 %v955, %v956
        %v958 = vrot.slane %v957, 2
        %v959 = vadd.f32 %v957, %v958
        %v960 = vrot.slane %v959, 1
        %v961 = vadd.f32 %v959, %v960
        %962 = vst.msk [vmem:[#allocation5 + $0x6] sm:$0x1] %vm685, %v961
        %v963 = vlaneseq
        %v964 = vshrl.u32 %v963, 7
        %v965 = vsub.s32 0, %v964
        %v966 = vrot.slane %v937, %v965
        %v967 = vmul.f32 %v951, %v966
        %v968 = vmul.f32 %v952, %v966
        %v969 = vsub.f32 %v939, %v967
        %v970 = vsub.f32 %v940, %v968
        %v971 = vlaneseq
        %v972 = vshrl.u32 %v971, 7
        %v973 = vsub.s32 0, %v972
        %v974 = vrot.slane %v938, %v973
        %v975 = vmul.f32 %v944, %v974
        %v976 = vmul.f32 %v949, %v974
        %v977 = vadd.f32 %v969, %v975
        %v978 = vadd.f32 %v970, %v976
        %979 = vst.msk [vmem:[#allocation7] sm:$0xff] %vm474, %v977
        %980 = vst.msk [vmem:[#allocation7 + $0x8] sm:$0xff] %vm474, %v978
        %v981 = vld [vmem:[#allocation2] sm:$0xff]
        %v982 = vld [vmem:[#allocation2 + $0x8] sm:$0xff]
        %v983 = vld [vmem:[#allocation3 + $0x7] sm:$0x1]
        %v984 = vld [vmem:[#allocation4 + $0x7] sm:$0x1]
        %v985 = vld [vmem:[#allocation7] sm:$0xff]
        %v986 = vld [vmem:[#allocation7 + $0x8] sm:$0xff]
        %988 = vset.pattern.permute.xlu0 7
        %989 = vperm.xlu0 %988, %v981
        %v990 = vpop.permute.xlu0 %989
        %993 = vset.pattern.permute.xlu0 7
        %994 = vperm.xlu0 %993, %v982
        %v995 = vpop.permute.xlu0 %994
        %v997 = vmul.f32 %v990, %v985
        %v998 = vmul.f32 %v995, %v986
        %v999 = vsel %vm474, %v997, 0.0
        %v1000 = vsel %vm474, %v998, 0.0
        %v1001 = vadd.f32 %v999, %v1000
        %v1002 = vrot.slane %v1001, 4
        %v1003 = vadd.f32 %v1001, %v1002
        %v1004 = vrot.slane %v1003, 2
        %v1005 = vadd.f32 %v1003, %v1004
        %v1006 = vrot.slane %v1005, 1
        %v1007 = vadd.f32 %v1005, %v1006
        %1008 = vst.msk [vmem:[#allocation5 + $0x7] sm:$0x1] %vm685, %v1007
        %v1009 = vlaneseq
        %v1010 = vshrl.u32 %v1009, 7
        %v1011 = vsub.s32 0, %v1010
        %v1012 = vrot.slane %v983, %v1011
        %v1013 = vmul.f32 %v997, %v1012
        %v1014 = vmul.f32 %v998, %v1012
        %v1015 = vsub.f32 %v985, %v1013
        %v1016 = vsub.f32 %v986, %v1014
        %v1017 = vlaneseq
        %v1018 = vshrl.u32 %v1017, 7
        %v1019 = vsub.s32 0, %v1018
        %v1020 = vrot.slane %v984, %v1019
        %v1021 = vmul.f32 %v990, %v1020
        %v1022 = vmul.f32 %v995, %v1020
        %v1023 = vadd.f32 %v1015, %v1021
        %v1024 = vadd.f32 %v1016, %v1022
        %1025 = vst.msk [vmem:[#allocation7] sm:$0xff] %vm474, %v1023
        %1026 = vst.msk [vmem:[#allocation7 + $0x8] sm:$0xff] %vm474, %v1024
        %v1027 = vld [vmem:[#allocation5] sm:$0xff]
        %v1028 = vpack.c.bf16 %v1027, %v1027
        %v1029 = vld [vmem:[#allocation17] sm:$0xf]
        %v1030 = vld [vmem:[#allocation17 + $0x4] sm:$0xf]
        %v1031 = vld [vmem:[#allocation17 + $0x8] sm:$0xf]
        %v1032 = vld [vmem:[#allocation17 + $0xc] sm:$0xf]
        %v1033 = vld [vmem:[#allocation6] sm:$0xff]
        %v1038 = vunpack.c.l.b16 %v1029
        %v1039 = vunpack.c.l.b16 %v1030
        %v1040 = vunpack.c.l.b16 %v1031
        %v1041 = vunpack.c.l.b16 %v1032
        %v1042 = vpack.c.b16 %v1039, %v1038
        %v1043 = vpack.c.b16 %v1041, %v1040
        %v1047 = vsel %vm474, %v1028, 0
        %1049 = vmatprep.subr.bf16.mxu0 0
        %1050 = vmatpush1.bf16.msra.mxu0 %v1042
        %1051 = vmatprep.subr.bf16.mxu0 0
        %1052 = vmatpush1.bf16.msra.mxu0 %v1043
        %1053 = vmatprep.subr.bf16.mxu0 0
        %1054 = vmatpush1.bf16.msra.mxu0 0
        %1055 = vmatprep.subr.bf16.mxu0 0
        %1056 = vmatpush1.bf16.msra.mxu0 0
        %1057 = vmatprep.subr.bf16.mxu0 0
        %1058 = vmatpush1.bf16.msra.mxu0 0
        %1059 = vmatprep.subr.bf16.mxu0 0
        %1060 = vmatpush1.bf16.msra.mxu0 0
        %1061 = vmatprep.subr.bf16.mxu0 0
        %1062 = vmatpush1.bf16.msra.mxu0 0
        %1063 = vmatprep.subr.bf16.mxu0 0
        %1064 = vmatpush1.bf16.msra.mxu0 0
        %1065 = vmatprep.subr.bf16.mxu0 0
        %1066 = vmatpush1.bf16.msra.mxu0 0
        %1067 = vmatprep.subr.bf16.mxu0 0
        %1068 = vmatpush1.bf16.msra.mxu0 0
        %1069 = vmatprep.subr.bf16.mxu0 0
        %1070 = vmatpush1.bf16.msra.mxu0 0
        %1071 = vmatprep.subr.bf16.mxu0 0
        %1072 = vmatpush1.bf16.msra.mxu0 0
        %1073 = vmatprep.subr.bf16.mxu0 0
        %1074 = vmatpush1.bf16.msra.mxu0 0
        %1075 = vmatprep.subr.bf16.mxu0 0
        %1076 = vmatpush1.bf16.msra.mxu0 0
        %1077 = vmatprep.subr.bf16.mxu0 0
        %1078 = vmatpush1.bf16.msra.mxu0 0
        %1079 = vmatprep.subr.bf16.mxu0 0
        %1080 = vmatpush1.bf16.msra.mxu0 0
        %1081 = vmatprep.mubr.bf16.mxu0 0
        %1082 = vmatmul.mubr.bf16.gmra.mrb[0].mxu0 %v1047
        %v1083 = vpop.f32.mrb[0].mxu0
        %v1084 = vadd.f32 %v1033, %v1083
        %v1085 = vpop.f32.mrb[0].mxu0
        %v1086 = vpop.f32.mrb[0].mxu0
        %v1087 = vpop.f32.mrb[0].mxu0
        %1088 = vdwg.mxu0
        %v1089 = vld [vmem:[%s7] sm:$0x1]
        %v1091 = vlaneseq
        %v1092 = vshrl.u32 %v1091, 7
        %v1093 = vsub.s32 0, %v1092
        %v1094 = vrot.slane %v1089, %v1093
        %v1096 = vadd.f32 %v1084, %v1094
        %v1097 = vtanh.pop %v1096
        %v1098 = vld [vmem:[%s8] sm:$0x1]
        %s1099 = sld [smem:[#allocation8]]
        %v1100 = vstv %s1099
        %v1102 = vsel %vm474, %v1098, 0
        %v1105 = vsel %vm474, %v1097, 0
        %1107 = vmatprep.subr.mxu0 0.0
        %1108 = vmatpush1.xpose.msra.mxu0 %v1105
        %1109 = vmatprep.subr.mxu0 0.0
        %1110 = vmatpush1.xpose.msra.mxu0 0.0
        %1111 = vmatprep.subr.mxu0 0.0
        %1112 = vmatpush1.xpose.msra.mxu0 0.0
        %1113 = vmatprep.subr.mxu0 0.0
        %1114 = vmatpush1.xpose.msra.mxu0 0.0
        %1115 = vmatprep.subr.mxu0 0.0
        %1116 = vmatpush1.xpose.msra.mxu0 0.0
        %1117 = vmatprep.subr.mxu0 0.0
        %1118 = vmatpush1.xpose.msra.mxu0 0.0
        %1119 = vmatprep.subr.mxu0 0.0
        %1120 = vmatpush1.xpose.msra.mxu0 0.0
        %1121 = vmatprep.subr.mxu0 0.0
        %1122 = vmatpush1.xpose.msra.mxu0 0.0
        %1123 = vmatprep.subr.mxu0 0.0
        %1124 = vmatpush1.xpose.msra.mxu0 0.0
        %1125 = vmatprep.subr.mxu0 0.0
        %1126 = vmatpush1.xpose.msra.mxu0 0.0
        %1127 = vmatprep.subr.mxu0 0.0
        %1128 = vmatpush1.xpose.msra.mxu0 0.0
        %1129 = vmatprep.subr.mxu0 0.0
        %1130 = vmatpush1.xpose.msra.mxu0 0.0
        %1131 = vmatprep.subr.mxu0 0.0
        %1132 = vmatpush1.xpose.msra.mxu0 0.0
        %1133 = vmatprep.subr.mxu0 0.0
        %1134 = vmatpush1.xpose.msra.mxu0 0.0
        %1135 = vmatprep.subr.mxu0 0.0
        %1136 = vmatpush1.xpose.msra.mxu0 0.0
        %1137 = vmatprep.subr.mxu0 0.0
        %1138 = vmatpush1.xpose.msra.mxu0 0.0
        %1139 = vmatprep.subr.mxu0 0.0
        %1140 = vmatpush1.xpose.msra.mxu0 0.0
        %1141 = vmatprep.subr.mxu0 0.0
        %1142 = vmatpush1.xpose.msra.mxu0 0.0
        %1143 = vmatprep.subr.mxu0 0.0
        %1144 = vmatpush1.xpose.msra.mxu0 0.0
        %1145 = vmatprep.subr.mxu0 0.0
        %1146 = vmatpush1.xpose.msra.mxu0 0.0
        %1147 = vmatprep.subr.mxu0 0.0
        %1148 = vmatpush1.xpose.msra.mxu0 0.0
        %1149 = vmatprep.subr.mxu0 0.0
        %1150 = vmatpush1.xpose.msra.mxu0 0.0
        %1151 = vmatprep.subr.mxu0 0.0
        %1152 = vmatpush1.xpose.msra.mxu0 0.0
        %1153 = vmatprep.subr.mxu0 0.0
        %1154 = vmatpush1.xpose.msra.mxu0 0.0
        %1155 = vmatprep.subr.mxu0 0.0
        %1156 = vmatpush1.xpose.msra.mxu0 0.0
        %1157 = vmatprep.subr.mxu0 0.0
        %1158 = vmatpush1.xpose.msra.mxu0 0.0
        %1159 = vmatprep.subr.mxu0 0.0
        %1160 = vmatpush1.xpose.msra.mxu0 0.0
        %1161 = vmatprep.subr.mxu0 0.0
        %1162 = vmatpush1.xpose.msra.mxu0 0.0
        %1163 = vmatprep.subr.mxu0 0.0
        %1164 = vmatpush1.xpose.msra.mxu0 0.0
        %1165 = vmatprep.subr.mxu0 0.0
        %1166 = vmatpush1.xpose.msra.mxu0 0.0
        %1167 = vmatprep.subr.mxu0 0.0
        %1168 = vmatpush1.xpose.msra.mxu0 0.0
        %1169 = vmatprep.subr.mxu0 0.0
        %1170 = vmatpush1.xpose.msra.mxu0 0.0
        %1171 = vmatprep.mubr.f32.mxu0 0.0
        %1172 = vmatmul.mubr.f32.gmra.mrb[0].mxu0 %v1102
        %v1173 = vpop.f32.mrb[0].mxu0
        %v1174 = vadd.f32 %v1100, %v1173
        %v1175 = vpop.f32.mrb[0].mxu0
        %1176 = vdwg.mxu0
        %v1177 = vxor.u32 %v1174, 2147483648
        %v1178 = vmul.f32 %v1177, 1.442695
        %v1179 = vpow.pop %v1178
        %v1180 = vadd.f32 %v1179, 1.0
        %v1181 = vrcp.pop %v1180
        %v1182 = vmul.f32 1.0, %v1181
        %vm1183 = vcmask 57344
        %1184 = vst.msk [vmem:[%s454] sm:$0x1] %vm1183, %v1182
        %s1185 = sand.u32 %s260, 1
        %s1186 = scalar_lea.sflag [#allocation11], %s1185
        %s1187 = sand.u32 %s260, 1
        %s1188 = scalar_lea.vmem [#allocation18], %s1187
        // Predicated region
        $region81: #{tpu_custom_call.1} parent=59 // pred_check
          %p1189 = pneg %p270
        $region82: #{tpu_custom_call.1} parent=59 // pred_check_branch
          %1191 = sbr.rel (%p1189) target = $region84
        $region83: #{tpu_custom_call.1} parent=59 // pred_region
          %s1193 = ssub.s32 16, 16
          %1194 = vsyncadd %s1186, %s1193
          %s1195 = smul.addr %s32, 16
          %s1196 = scalar_lea.hbm %s10, %s1195
          %s1198 = sshll.u32 %s1188, 4
          %s1199 = int_to_ptr.vmem [resolvable:$true] %s1198
          %1201 = dma.vmem_to_hbm [thread:$0]  %s1199, 16, %s1196, %s1186
        $region84: #{tpu_custom_call.1} parent=59 // pred_fallthru
          _
      $region60: #{tpu_custom_call.1} parent=5 // pred_fallthru
        _
      %p1202 = scmp.le.s32.totalorder 2, %s27
      // Predicated region
      $region85: #{tpu_custom_call.1} parent=5 // pred_check
        %p1203 = pneg %p1202
      $region86: #{tpu_custom_call.1} parent=5 // pred_check_branch
        %1205 = sbr.rel (%p1203) target = $region88
      $region87: #{tpu_custom_call.1} parent=5 // pred_region
        %s1206 = ssub.s32 %s27, 2
        // Predicated region
        $region89: #{tpu_custom_call.1} parent=87 // pred_check
          %p1207 = pneg %p276
        $region90: #{tpu_custom_call.1} parent=87 // pred_check_branch
          %1209 = sbr.rel (%p1207) target = $region92
        $region91: #{tpu_custom_call.1} parent=87 // pred_region
          %s1210 = sand.u32 %s261, 1
          %s1211 = scalar_lea.sflag [#allocation11], %s1210
          %s1212 = sand.u32 %s261, 1
          %s1213 = scalar_lea.vmem [#allocation18], %s1212
          %1214 = dma.done %s1211, 16
        $region92: #{tpu_custom_call.1} parent=87 // pred_fallthru
          _
      $region88: #{tpu_custom_call.1} parent=5 // pred_fallthru
        _
    $region6: #{tpu_custom_call.1} parent=1 // loop_footer
      %s31 = sadd.s32 1, %s27
    $region7: #{tpu_custom_call.1} parent=1 // loop_footer_branch
      %26 = sbr.rel target = $region3
    $region8: #{tpu_custom_call.1} parent=1 // loop_exit
      _
    %1215 = vsyncpa [#allocation10], 1
    %s1216 = scalar_lea.sflag [#allocation10], 1
    %1217 = vsyncpa %s1216, 1
    %1218 = vsyncpa [#allocation13], 1
    %s1219 = scalar_lea.sflag [#allocation13], 1
    %1220 = vsyncpa %s1219, 1
    %1221 = vsyncpa [#allocation16], 1
    %1222 = vsyncpa [#allocation11], 1
    %s1223 = scalar_lea.sflag [#allocation11], 1
    %1224 = vsyncpa %s1223, 1

</llo_original>
